<compile_context>
chip_gen: v5e
topology: v5e:2x2
jax: 0.10.0
libtpu: 0.0.40
codegen_flags: <defaults>
</compile_context>

<pallas_src>
import functools
import math

import jax
import jax.numpy as jnp
from jax.experimental import pallas as pl
from jax.experimental.pallas import tpu as pltpu

LANE_PAD = 128  # pad the 33-wide (classifier∘regression) tail to one lane tile


# ------------------------------ fused kernel --------------------------------

def _fused_bert_kernel(x_ref, mask_ref,
                       emb_g_ref, emb_b_ref,
                       wqkv_ref, bqkv_ref, wo_ref, bo_ref,
                       ln1_g_ref, ln1_b_ref,
                       wi_ref, bi_ref, wf_ref, bf_ref,
                       ln2_g_ref, ln2_b_ref,
                       pool_w_ref, pool_b_ref,
                       head_w_ref, head_b_ref,
                       out_ref,
                       *, batch, seq, hidden, num_layers, num_heads, head_dim,
                       eps):
    """Entire BERT forward (all batch elements) in one kernel invocation."""

    def layernorm(h, g, b):
        mu = jnp.mean(h, axis=-1, keepdims=True)
        var = jnp.mean(jnp.square(h - mu), axis=-1, keepdims=True)
        return (h - mu) * jax.lax.rsqrt(var + eps) * g + b

    def matmul(a, b):
        return jnp.dot(a, b, preferred_element_type=jnp.float32)

    # ---- embedding LayerNorm on the batch-folded [B*S, H] slab ----
    x = layernorm(x_ref[...], emb_g_ref[...], emb_b_ref[...])      # [B*S, H]
    mask_all = mask_ref[...]                                        # [B, S, S]

    # ---- encoder layers (unrolled; L is tiny, all weights VMEM-resident) ----
    for l in range(num_layers):
        # fused QKV projection: ONE matmul for all heads of all batch rows
        qkv = matmul(x, wqkv_ref[l]) + bqkv_ref[l]                  # [B*S, 3H]

        ctx_rows = []
        for b in range(batch):
            r0 = b * seq
            mask_b = mask_all[b]                                    # [S, S]
            ctx_heads = []
            for h in range(num_heads):
                c0 = h * head_dim
                q = qkv[r0:r0 + seq, c0:c0 + head_dim]                        # [S, dh]
                k = qkv[r0:r0 + seq, hidden + c0:hidden + c0 + head_dim]      # [S, dh]
                v = qkv[r0:r0 + seq, 2 * hidden + c0:2 * hidden + c0 + head_dim]
                # scores (1/sqrt(dh) already folded into Wq/bq host-side)
                s = jax.lax.dot_general(q, k, (((1,), (1,)), ((), ())),
                                        preferred_element_type=jnp.float32)   # [S, S]
                s = s + mask_b
                s = s - jnp.max(s, axis=-1, keepdims=True)
                p = jnp.exp(s)
                p = p * pl.reciprocal(jnp.sum(p, axis=-1, keepdims=True),
                                      approx=True)
                ctx_heads.append(matmul(p, v))                                # [S, dh]
            ctx_rows.append(jnp.concatenate(ctx_heads, axis=-1))              # [S, H]
        ctx = jnp.concatenate(ctx_rows, axis=0)                               # [B*S, H]

        # fused output projection: one matmul over the concatenated heads
        attn = matmul(ctx, wo_ref[l]) + bo_ref[l]
        x = layernorm(attn + x, ln1_g_ref[l], ln1_b_ref[l])

        # feed-forward
        inter = matmul(x, wi_ref[l]) + bi_ref[l]
        # TODO(synk): HF BERT uses exact erf-GELU; tanh approximation used here.
        inter = jax.nn.gelu(inter, approximate=True)
        ffn = matmul(inter, wf_ref[l]) + bf_ref[l]
        x = layernorm(ffn + x, ln2_g_ref[l], ln2_b_ref[l])

    # ---- pooler on the CLS token of every batch element ----
    cls_tok = jnp.concatenate([x[b * seq:b * seq + 1, :] for b in range(batch)],
                              axis=0)                               # [B, H]
    pooled = jnp.tanh(matmul(cls_tok, pool_w_ref[...]) + pool_b_ref[...])
    # classifier -> (identity dropout) -> regression folded into one linear
    scores = matmul(pooled, head_w_ref[...]) + head_b_ref[...]      # [B, 128] padded
    out_ref[...] = scores.astype(out_ref.dtype)


# --------------------------- parameters (synthetic) --------------------------

def init_params(key, cfg):
    H, I, L, NL = cfg["hidden"], cfg["inter"], cfg["layers"], cfg["num_labels"]
    keys = iter(jax.random.split(key, 32 + 8 * L))

    def w(shape, scale=0.02):
        return (scale * jax.random.normal(next(keys), shape)).astype(jnp.float32)

    zeros = lambda s: jnp.zeros(s, jnp.float32)
    ones = lambda s: jnp.ones(s, jnp.float32)

    params = {
        "word_emb": w((cfg["vocab"], H)),
        "pos_emb": w((cfg["max_pos"], H)),
        "type_emb": w((cfg["type_vocab"], H)),
        "emb_ln_g": ones((H,)), "emb_ln_b": zeros((H,)),
        "pooler_w": w((H, H)), "pooler_b": zeros((H,)),
        "cls_w": w((H, NL)), "cls_b": zeros((NL,)),       # bert classifier head
        "reg_w": w((NL, NL)), "reg_b": zeros((NL,)),      # BertModel_1.regression
        "layers": [],
    }
    for _ in range(L):
        params["layers"].append({
            "wq": w((H, H)), "bq": zeros((H,)),
            "wk": w((H, H)), "bk": zeros((H,)),
            "wv": w((H, H)), "bv": zeros((H,)),
            "wo": w((H, H)), "bo": zeros((H,)),
            "ln1_g": ones((H,)), "ln1_b": zeros((H,)),
            "wi": w((H, I)), "bi": zeros((I,)),
            "wf": w((I, H)), "bf": zeros((H,)),
            "ln2_g": ones((H,)), "ln2_b": zeros((H,)),
        })
    return params


# ------------------------------- forward pass --------------------------------

def bert_model_1_forward(params, input_ids, token_type_ids, attention_mask, cfg):
    B, S = input_ids.shape
    H, nh = cfg["hidden"], cfg["heads"]
    L, I, NL = cfg["layers"], cfg["inter"], cfg["num_labels"]
    dh = H // nh
    NP = LANE_PAD
    scale = 1.0 / math.sqrt(dh)

    # --- embedding gathers (data-dependent gather stays outside the kernel) ---
    emb = (params["word_emb"][input_ids]
           + params["pos_emb"][jnp.arange(S)][None, :, :]
           + params["type_emb"][token_type_ids]).astype(jnp.float32)   # [B,S,H]
    emb = emb.reshape(B * S, H)                                        # batch folded into M

    # additive attention-mask bias, pre-broadcast to [B,S,S] so the kernel
    # never re-emits a broadcast inside the head/layer loops
    mask_bias = (1.0 - attention_mask.astype(jnp.float32)) * -10000.0  # [B,S]
    mask_bias = jnp.broadcast_to(mask_bias[:, None, :], (B, S, S)).astype(jnp.float32)

    # --- pack per-layer weights host-side (fused QKV; 1/sqrt(dh) into Wq/bq) ---
    lyrs = params["layers"]
    wqkv = jnp.stack([jnp.concatenate([l["wq"] * scale, l["wk"], l["wv"]], axis=1)
                      for l in lyrs])                                  # [L,H,3H]
    bqkv = jnp.stack([jnp.concatenate([l["bq"] * scale, l["bk"], l["bv"]])[None, :]
                      for l in lyrs])                                  # [L,1,3H]
    wo = jnp.stack([l["wo"] for l in lyrs])                            # [L,H,H]
    bo = jnp.stack([l["bo"] for l in lyrs]).reshape(L, 1, H)
    ln1_g = jnp.stack([l["ln1_g"] for l in lyrs]).reshape(L, 1, H)
    ln1_b = jnp.stack([l["ln1_b"] for l in lyrs]).reshape(L, 1, H)
    wi = jnp.stack([l["wi"] for l in lyrs])                            # [L,H,I]
    bi = jnp.stack([l["bi"] for l in lyrs]).reshape(L, 1, I)
    wf = jnp.stack([l["wf"] for l in lyrs])                            # [L,I,H]
    bf = jnp.stack([l["bf"] for l in lyrs]).reshape(L, 1, H)
    ln2_g = jnp.stack([l["ln2_g"] for l in lyrs]).reshape(L, 1, H)
    ln2_b = jnp.stack([l["ln2_b"] for l in lyrs]).reshape(L, 1, H)

    # --- fold classifier + regression into ONE linear (dropout is identity),
    #     then lane-pad the 33-wide tail to 128 lanes for a dense store ---
    head_w = params["cls_w"] @ params["reg_w"]                         # [H,NL]
    head_b = params["cls_b"] @ params["reg_w"] + params["reg_b"]       # [NL]
    head_w_p = jnp.zeros((H, NP), jnp.float32).at[:, :NL].set(head_w)
    head_b_p = jnp.zeros((1, NP), jnp.float32).at[0, :NL].set(head_b)

    kern = functools.partial(_fused_bert_kernel,
                             batch=B, seq=S, hidden=H,
                             num_layers=L, num_heads=nh, head_dim=dh,
                             eps=cfg["eps"])

    # No grid: the whole (tiny) problem is one kernel invocation with every
    # operand fully VMEM-resident (~1-2 MiB after tile padding, far under the
    # 16/32 MiB scoped defaults on v5e/v6e/v7x).
    out = pl.pallas_call(
        kern,
        out_shape=jax.ShapeDtypeStruct((B, NP), jnp.float32),
    )(emb, mask_bias,
      params["emb_ln_g"].reshape(1, H), params["emb_ln_b"].reshape(1, H),
      wqkv, bqkv, wo, bo, ln1_g, ln1_b, wi, bi, wf, bf, ln2_g, ln2_b,
      params["pooler_w"], params["pooler_b"].reshape(1, H),
      head_w_p, head_b_p)

    return out[:, :NL]


# ----------------------------------- main ------------------------------------

if __name__ == "__main__":
    cfg = dict(vocab=100, hidden=32, layers=2, heads=4, inter=64,
               max_pos=16, type_vocab=2, num_labels=33, eps=1e-12)

    key = jax.random.PRNGKey(0)
    pkey, dkey = jax.random.split(key)
    params = init_params(pkey, cfg)

    B, S = 2, 8
    input_ids = jax.random.randint(dkey, (B, S), 0, cfg["vocab"], dtype=jnp.int32)
    token_type_ids = jnp.zeros((B, S), jnp.int32)
    attention_mask = jnp.ones((B, S), jnp.int32)

    fwd = jax.jit(functools.partial(bert_model_1_forward, cfg=cfg))
    scores = jax.block_until_ready(fwd(params, input_ids, token_type_ids,
                                       attention_mask))
    assert scores.shape == (B, cfg["num_labels"])
    assert bool(jnp.all(jnp.isfinite(scores)))
    print("KERNEL_OK")
</pallas_src>

<mosaic_0001>
module attributes {stable_mosaic.version = 11 : i64} {
  func.func @_fused_bert_kernel(%arg0: memref<16x32xf32, #tpu.memory_space<vmem>>, %arg1: memref<2x8x8xf32, #tpu.memory_space<vmem>>, %arg2: memref<1x32xf32, #tpu.memory_space<vmem>>, %arg3: memref<1x32xf32, #tpu.memory_space<vmem>>, %arg4: memref<2x32x96xf32, #tpu.memory_space<vmem>>, %arg5: memref<2x1x96xf32, #tpu.memory_space<vmem>>, %arg6: memref<2x32x32xf32, #tpu.memory_space<vmem>>, %arg7: memref<2x1x32xf32, #tpu.memory_space<vmem>>, %arg8: memref<2x1x32xf32, #tpu.memory_space<vmem>>, %arg9: memref<2x1x32xf32, #tpu.memory_space<vmem>>, %arg10: memref<2x32x64xf32, #tpu.memory_space<vmem>>, %arg11: memref<2x1x64xf32, #tpu.memory_space<vmem>>, %arg12: memref<2x64x32xf32, #tpu.memory_space<vmem>>, %arg13: memref<2x1x32xf32, #tpu.memory_space<vmem>>, %arg14: memref<2x1x32xf32, #tpu.memory_space<vmem>>, %arg15: memref<2x1x32xf32, #tpu.memory_space<vmem>>, %arg16: memref<32x32xf32, #tpu.memory_space<vmem>>, %arg17: memref<1x32xf32, #tpu.memory_space<vmem>>, %arg18: memref<32x128xf32, #tpu.memory_space<vmem>>, %arg19: memref<1x128xf32, #tpu.memory_space<vmem>>, %arg20: memref<2x128xf32, #tpu.memory_space<vmem>>) attributes {dimension_semantics = [], scalar_prefetch = 0 : i64, scratch_operands = 0 : i64, tpu.core_type = #tpu.core_type<tc>} {
    %c0 = arith.constant 0 : index
    %c0_0 = arith.constant 0 : index
    %0 = vector.load %arg0[%c0, %c0_0] : memref<16x32xf32, #tpu.memory_space<vmem>>, vector<16x32xf32>
    %c0_1 = arith.constant 0 : index
    %c0_2 = arith.constant 0 : index
    %1 = vector.load %arg2[%c0_1, %c0_2] : memref<1x32xf32, #tpu.memory_space<vmem>>, vector<1x32xf32>
    %c0_3 = arith.constant 0 : index
    %c0_4 = arith.constant 0 : index
    %2 = vector.load %arg3[%c0_3, %c0_4] : memref<1x32xf32, #tpu.memory_space<vmem>>, vector<1x32xf32>
    %cst = arith.constant dense<0.000000e+00> : vector<16xf32>
    %3 = vector.multi_reduction <add>, %0, %cst [1] : vector<16x32xf32> to vector<16xf32>
    %4 = vector.shape_cast %3 : vector<16xf32> to vector<16x1xf32>
    %cst_5 = arith.constant 3.200000e+01 : f32
    %5 = vector.broadcast %cst_5 : f32 to vector<16x1xf32>
    %6 = arith.divf %4, %5 : vector<16x1xf32>
    %7 = vector.broadcast %6 : vector<16x1xf32> to vector<16x32xf32>
    %8 = arith.subf %0, %7 : vector<16x32xf32>
    %9 = arith.mulf %8, %8 : vector<16x32xf32>
    %cst_6 = arith.constant dense<0.000000e+00> : vector<16xf32>
    %10 = vector.multi_reduction <add>, %9, %cst_6 [1] : vector<16x32xf32> to vector<16xf32>
    %11 = vector.shape_cast %10 : vector<16xf32> to vector<16x1xf32>
    %cst_7 = arith.constant 3.200000e+01 : f32
    %12 = vector.broadcast %cst_7 : f32 to vector<16x1xf32>
    %13 = arith.divf %11, %12 : vector<16x1xf32>
    %14 = vector.broadcast %6 : vector<16x1xf32> to vector<16x32xf32>
    %15 = arith.subf %0, %14 : vector<16x32xf32>
    %cst_8 = arith.constant 9.99999996E-13 : f32
    %16 = vector.broadcast %cst_8 : f32 to vector<16x1xf32>
    %17 = arith.addf %13, %16 : vector<16x1xf32>
    %18 = math.rsqrt %17 : vector<16x1xf32>
    %19 = vector.broadcast %18 : vector<16x1xf32> to vector<16x32xf32>
    %20 = arith.mulf %15, %19 : vector<16x32xf32>
    %21 = vector.broadcast %1 : vector<1x32xf32> to vector<16x32xf32>
    %22 = arith.mulf %20, %21 : vector<16x32xf32>
    %23 = vector.broadcast %2 : vector<1x32xf32> to vector<16x32xf32>
    %24 = arith.addf %22, %23 : vector<16x32xf32>
    %c0_9 = arith.constant 0 : index
    %c0_10 = arith.constant 0 : index
    %c0_11 = arith.constant 0 : index
    %25 = vector.load %arg1[%c0_9, %c0_10, %c0_11] : memref<2x8x8xf32, #tpu.memory_space<vmem>>, vector<2x8x8xf32>
    %c0_12 = arith.constant 0 : index
    %c0_13 = arith.constant 0 : index
    %c0_14 = arith.constant 0 : index
    %26 = vector.load %arg4[%c0_12, %c0_13, %c0_14] : memref<2x32x96xf32, #tpu.memory_space<vmem>>, vector<1x32x96xf32>
    %27 = vector.shape_cast %26 : vector<1x32x96xf32> to vector<32x96xf32>
    %cst_15 = arith.constant dense<0.000000e+00> : vector<16x96xf32>
    %28 = tpu.matmul %24, %27, %cst_15 {dimension_numbers = #tpu.dot_dimension_numbers<[1], [0], [0], [1], [0, 0, 1, 1], [], []>} : vector<16x32xf32>, vector<32x96xf32>, vector<16x96xf32> -> vector<16x96xf32>
    %c0_16 = arith.constant 0 : index
    %c0_17 = arith.constant 0 : index
    %c0_18 = arith.constant 0 : index
    %29 = vector.load %arg5[%c0_16, %c0_17, %c0_18] : memref<2x1x96xf32, #tpu.memory_space<vmem>>, vector<1x1x96xf32>
    %30 = vector.shape_cast %29 : vector<1x1x96xf32> to vector<1x96xf32>
    %31 = vector.broadcast %30 : vector<1x96xf32> to vector<16x96xf32>
    %32 = arith.addf %28, %31 : vector<16x96xf32>
    %33 = vector.extract_strided_slice %25 {offsets = [0, 0, 0], sizes = [1, 8, 8], strides = [1, 1, 1]} : vector<2x8x8xf32> to vector<1x8x8xf32>
    %34 = vector.shape_cast %33 : vector<1x8x8xf32> to vector<8x8xf32>
    %35 = vector.extract_strided_slice %32 {offsets = [0, 0], sizes = [8, 8], strides = [1, 1]} : vector<16x96xf32> to vector<8x8xf32>
    %36 = vector.extract_strided_slice %32 {offsets = [0, 32], sizes = [8, 8], strides = [1, 1]} : vector<16x96xf32> to vector<8x8xf32>
    %37 = vector.extract_strided_slice %32 {offsets = [0, 64], sizes = [8, 8], strides = [1, 1]} : vector<16x96xf32> to vector<8x8xf32>
    %cst_19 = arith.constant dense<0.000000e+00> : vector<8x8xf32>
    %38 = tpu.matmul %35, %36, %cst_19 {dimension_numbers = #tpu.dot_dimension_numbers<[1], [1], [0], [0], [0, 0, 1, 0], [], []>} : vector<8x8xf32>, vector<8x8xf32>, vector<8x8xf32> -> vector<8x8xf32>
    %39 = arith.addf %38, %34 : vector<8x8xf32>
    %cst_20 = arith.constant dense<0xFF800000> : vector<8xf32>
    %40 = vector.multi_reduction <maximumf>, %39, %cst_20 [1] : vector<8x8xf32> to vector<8xf32>
    %41 = vector.shape_cast %40 : vector<8xf32> to vector<8x1xf32>
    %42 = vector.broadcast %41 : vector<8x1xf32> to vector<8x8xf32>
    %43 = arith.subf %39, %42 : vector<8x8xf32>
    %44 = math.exp %43 : vector<8x8xf32>
    %cst_21 = arith.constant dense<0.000000e+00> : vector<8xf32>
    %45 = vector.multi_reduction <add>, %44, %cst_21 [1] : vector<8x8xf32> to vector<8xf32>
    %46 = vector.shape_cast %45 : vector<8xf32> to vector<8x1xf32>
    %47 = tpu.reciprocal %46 {approx = true} : vector<8x1xf32> -> vector<8x1xf32>
    %48 = vector.broadcast %47 : vector<8x1xf32> to vector<8x8xf32>
    %49 = arith.mulf %44, %48 : vector<8x8xf32>
    %cst_22 = arith.constant dense<0.000000e+00> : vector<8x8xf32>
    %50 = tpu.matmul %49, %37, %cst_22 {dimension_numbers = #tpu.dot_dimension_numbers<[1], [0], [0], [1], [0, 0, 1, 1], [], []>} : vector<8x8xf32>, vector<8x8xf32>, vector<8x8xf32> -> vector<8x8xf32>
    %51 = vector.extract_strided_slice %32 {offsets = [0, 8], sizes = [8, 8], strides = [1, 1]} : vector<16x96xf32> to vector<8x8xf32>
    %52 = vector.extract_strided_slice %32 {offsets = [0, 40], sizes = [8, 8], strides = [1, 1]} : vector<16x96xf32> to vector<8x8xf32>
    %53 = vector.extract_strided_slice %32 {offsets = [0, 72], sizes = [8, 8], strides = [1, 1]} : vector<16x96xf32> to vector<8x8xf32>
    %cst_23 = arith.constant dense<0.000000e+00> : vector<8x8xf32>
    %54 = tpu.matmul %51, %52, %cst_23 {dimension_numbers = #tpu.dot_dimension_numbers<[1], [1], [0], [0], [0, 0, 1, 0], [], []>} : vector<8x8xf32>, vector<8x8xf32>, vector<8x8xf32> -> vector<8x8xf32>
    %55 = arith.addf %54, %34 : vector<8x8xf32>
    %cst_24 = arith.constant dense<0xFF800000> : vector<8xf32>
    %56 = vector.multi_reduction <maximumf>, %55, %cst_24 [1] : vector<8x8xf32> to vector<8xf32>
    %57 = vector.shape_cast %56 : vector<8xf32> to vector<8x1xf32>
    %58 = vector.broadcast %57 : vector<8x1xf32> to vector<8x8xf32>
    %59 = arith.subf %55, %58 : vector<8x8xf32>
    %60 = math.exp %59 : vector<8x8xf32>
    %cst_25 = arith.constant dense<0.000000e+00> : vector<8xf32>
    %61 = vector.multi_reduction <add>, %60, %cst_25 [1] : vector<8x8xf32> to vector<8xf32>
    %62 = vector.shape_cast %61 : vector<8xf32> to vector<8x1xf32>
    %63 = tpu.reciprocal %62 {approx = true} : vector<8x1xf32> -> vector<8x1xf32>
    %64 = vector.broadcast %63 : vector<8x1xf32> to vector<8x8xf32>
    %65 = arith.mulf %60, %64 : vector<8x8xf32>
    %cst_26 = arith.constant dense<0.000000e+00> : vector<8x8xf32>
    %66 = tpu.matmul %65, %53, %cst_26 {dimension_numbers = #tpu.dot_dimension_numbers<[1], [0], [0], [1], [0, 0, 1, 1], [], []>} : vector<8x8xf32>, vector<8x8xf32>, vector<8x8xf32> -> vector<8x8xf32>
    %67 = vector.extract_strided_slice %32 {offsets = [0, 16], sizes = [8, 8], strides = [1, 1]} : vector<16x96xf32> to vector<8x8xf32>
    %68 = vector.extract_strided_slice %32 {offsets = [0, 48], sizes = [8, 8], strides = [1, 1]} : vector<16x96xf32> to vector<8x8xf32>
    %69 = vector.extract_strided_slice %32 {offsets = [0, 80], sizes = [8, 8], strides = [1, 1]} : vector<16x96xf32> to vector<8x8xf32>
    %cst_27 = arith.constant dense<0.000000e+00> : vector<8x8xf32>
    %70 = tpu.matmul %67, %68, %cst_27 {dimension_numbers = #tpu.dot_dimension_numbers<[1], [1], [0], [0], [0, 0, 1, 0], [], []>} : vector<8x8xf32>, vector<8x8xf32>, vector<8x8xf32> -> vector<8x8xf32>
    %71 = arith.addf %70, %34 : vector<8x8xf32>
    %cst_28 = arith.constant dense<0xFF800000> : vector<8xf32>
    %72 = vector.multi_reduction <maximumf>, %71, %cst_28 [1] : vector<8x8xf32> to vector<8xf32>
    %73 = vector.shape_cast %72 : vector<8xf32> to vector<8x1xf32>
    %74 = vector.broadcast %73 : vector<8x1xf32> to vector<8x8xf32>
    %75 = arith.subf %71, %74 : vector<8x8xf32>
    %76 = math.exp %75 : vector<8x8xf32>
    %cst_29 = arith.constant dense<0.000000e+00> : vector<8xf32>
    %77 = vector.multi_reduction <add>, %76, %cst_29 [1] : vector<8x8xf32> to vector<8xf32>
    %78 = vector.shape_cast %77 : vector<8xf32> to vector<8x1xf32>
    %79 = tpu.reciprocal %78 {approx = true} : vector<8x1xf32> -> vector<8x1xf32>
    %80 = vector.broadcast %79 : vector<8x1xf32> to vector<8x8xf32>
    %81 = arith.mulf %76, %80 : vector<8x8xf32>
    %cst_30 = arith.constant dense<0.000000e+00> : vector<8x8xf32>
    %82 = tpu.matmul %81, %69, %cst_30 {dimension_numbers = #tpu.dot_dimension_numbers<[1], [0], [0], [1], [0, 0, 1, 1], [], []>} : vector<8x8xf32>, vector<8x8xf32>, vector<8x8xf32> -> vector<8x8xf32>
    %83 = vector.extract_strided_slice %32 {offsets = [0, 24], sizes = [8, 8], strides = [1, 1]} : vector<16x96xf32> to vector<8x8xf32>
    %84 = vector.extract_strided_slice %32 {offsets = [0, 56], sizes = [8, 8], strides = [1, 1]} : vector<16x96xf32> to vector<8x8xf32>
    %85 = vector.extract_strided_slice %32 {offsets = [0, 88], sizes = [8, 8], strides = [1, 1]} : vector<16x96xf32> to vector<8x8xf32>
    %cst_31 = arith.constant dense<0.000000e+00> : vector<8x8xf32>
    %86 = tpu.matmul %83, %84, %cst_31 {dimension_numbers = #tpu.dot_dimension_numbers<[1], [1], [0], [0], [0, 0, 1, 0], [], []>} : vector<8x8xf32>, vector<8x8xf32>, vector<8x8xf32> -> vector<8x8xf32>
    %87 = arith.addf %86, %34 : vector<8x8xf32>
    %cst_32 = arith.constant dense<0xFF800000> : vector<8xf32>
    %88 = vector.multi_reduction <maximumf>, %87, %cst_32 [1] : vector<8x8xf32> to vector<8xf32>
    %89 = vector.shape_cast %88 : vector<8xf32> to vector<8x1xf32>
    %90 = vector.broadcast %89 : vector<8x1xf32> to vector<8x8xf32>
    %91 = arith.subf %87, %90 : vector<8x8xf32>
    %92 = math.exp %91 : vector<8x8xf32>
    %cst_33 = arith.constant dense<0.000000e+00> : vector<8xf32>
    %93 = vector.multi_reduction <add>, %92, %cst_33 [1] : vector<8x8xf32> to vector<8xf32>
    %94 = vector.shape_cast %93 : vector<8xf32> to vector<8x1xf32>
    %95 = tpu.reciprocal %94 {approx = true} : vector<8x1xf32> -> vector<8x1xf32>
    %96 = vector.broadcast %95 : vector<8x1xf32> to vector<8x8xf32>
    %97 = arith.mulf %92, %96 : vector<8x8xf32>
    %cst_34 = arith.constant dense<0.000000e+00> : vector<8x8xf32>
    %98 = tpu.matmul %97, %85, %cst_34 {dimension_numbers = #tpu.dot_dimension_numbers<[1], [0], [0], [1], [0, 0, 1, 1], [], []>} : vector<8x8xf32>, vector<8x8xf32>, vector<8x8xf32> -> vector<8x8xf32>
    %99 = tpu.concatenate %50, %66, %82, %98 in 1 : vector<8x8xf32>, vector<8x8xf32>, vector<8x8xf32>, vector<8x8xf32> -> vector<8x32xf32>
    %100 = vector.extract_strided_slice %25 {offsets = [1, 0, 0], sizes = [1, 8, 8], strides = [1, 1, 1]} : vector<2x8x8xf32> to vector<1x8x8xf32>
    %101 = vector.shape_cast %100 : vector<1x8x8xf32> to vector<8x8xf32>
    %102 = vector.extract_strided_slice %32 {offsets = [8, 0], sizes = [8, 8], strides = [1, 1]} : vector<16x96xf32> to vector<8x8xf32>
    %103 = vector.extract_strided_slice %32 {offsets = [8, 32], sizes = [8, 8], strides = [1, 1]} : vector<16x96xf32> to vector<8x8xf32>
    %104 = vector.extract_strided_slice %32 {offsets = [8, 64], sizes = [8, 8], strides = [1, 1]} : vector<16x96xf32> to vector<8x8xf32>
    %cst_35 = arith.constant dense<0.000000e+00> : vector<8x8xf32>
    %105 = tpu.matmul %102, %103, %cst_35 {dimension_numbers = #tpu.dot_dimension_numbers<[1], [1], [0], [0], [0, 0, 1, 0], [], []>} : vector<8x8xf32>, vector<8x8xf32>, vector<8x8xf32> -> vector<8x8xf32>
    %106 = arith.addf %105, %101 : vector<8x8xf32>
    %cst_36 = arith.constant dense<0xFF800000> : vector<8xf32>
    %107 = vector.multi_reduction <maximumf>, %106, %cst_36 [1] : vector<8x8xf32> to vector<8xf32>
    %108 = vector.shape_cast %107 : vector<8xf32> to vector<8x1xf32>
    %109 = vector.broadcast %108 : vector<8x1xf32> to vector<8x8xf32>
    %110 = arith.subf %106, %109 : vector<8x8xf32>
    %111 = math.exp %110 : vector<8x8xf32>
    %cst_37 = arith.constant dense<0.000000e+00> : vector<8xf32>
    %112 = vector.multi_reduction <add>, %111, %cst_37 [1] : vector<8x8xf32> to vector<8xf32>
    %113 = vector.shape_cast %112 : vector<8xf32> to vector<8x1xf32>
    %114 = tpu.reciprocal %113 {approx = true} : vector<8x1xf32> -> vector<8x1xf32>
    %115 = vector.broadcast %114 : vector<8x1xf32> to vector<8x8xf32>
    %116 = arith.mulf %111, %115 : vector<8x8xf32>
    %cst_38 = arith.constant dense<0.000000e+00> : vector<8x8xf32>
    %117 = tpu.matmul %116, %104, %cst_38 {dimension_numbers = #tpu.dot_dimension_numbers<[1], [0], [0], [1], [0, 0, 1, 1], [], []>} : vector<8x8xf32>, vector<8x8xf32>, vector<8x8xf32> -> vector<8x8xf32>
    %118 = vector.extract_strided_slice %32 {offsets = [8, 8], sizes = [8, 8], strides = [1, 1]} : vector<16x96xf32> to vector<8x8xf32>
    %119 = vector.extract_strided_slice %32 {offsets = [8, 40], sizes = [8, 8], strides = [1, 1]} : vector<16x96xf32> to vector<8x8xf32>
    %120 = vector.extract_strided_slice %32 {offsets = [8, 72], sizes = [8, 8], strides = [1, 1]} : vector<16x96xf32> to vector<8x8xf32>
    %cst_39 = arith.constant dense<0.000000e+00> : vector<8x8xf32>
    %121 = tpu.matmul %118, %119, %cst_39 {dimension_numbers = #tpu.dot_dimension_numbers<[1], [1], [0], [0], [0, 0, 1, 0], [], []>} : vector<8x8xf32>, vector<8x8xf32>, vector<8x8xf32> -> vector<8x8xf32>
    %122 = arith.addf %121, %101 : vector<8x8xf32>
    %cst_40 = arith.constant dense<0xFF800000> : vector<8xf32>
    %123 = vector.multi_reduction <maximumf>, %122, %cst_40 [1] : vector<8x8xf32> to vector<8xf32>
    %124 = vector.shape_cast %123 : vector<8xf32> to vector<8x1xf32>
    %125 = vector.broadcast %124 : vector<8x1xf32> to vector<8x8xf32>
    %126 = arith.subf %122, %125 : vector<8x8xf32>
    %127 = math.exp %126 : vector<8x8xf32>
    %cst_41 = arith.constant dense<0.000000e+00> : vector<8xf32>
    %128 = vector.multi_reduction <add>, %127, %cst_41 [1] : vector<8x8xf32> to vector<8xf32>
    %129 = vector.shape_cast %128 : vector<8xf32> to vector<8x1xf32>
    %130 = tpu.reciprocal %129 {approx = true} : vector<8x1xf32> -> vector<8x1xf32>
    %131 = vector.broadcast %130 : vector<8x1xf32> to vector<8x8xf32>
    %132 = arith.mulf %127, %131 : vector<8x8xf32>
    %cst_42 = arith.constant dense<0.000000e+00> : vector<8x8xf32>
    %133 = tpu.matmul %132, %120, %cst_42 {dimension_numbers = #tpu.dot_dimension_numbers<[1], [0], [0], [1], [0, 0, 1, 1], [], []>} : vector<8x8xf32>, vector<8x8xf32>, vector<8x8xf32> -> vector<8x8xf32>
    %134 = vector.extract_strided_slice %32 {offsets = [8, 16], sizes = [8, 8], strides = [1, 1]} : vector<16x96xf32> to vector<8x8xf32>
    %135 = vector.extract_strided_slice %32 {offsets = [8, 48], sizes = [8, 8], strides = [1, 1]} : vector<16x96xf32> to vector<8x8xf32>
    %136 = vector.extract_strided_slice %32 {offsets = [8, 80], sizes = [8, 8], strides = [1, 1]} : vector<16x96xf32> to vector<8x8xf32>
    %cst_43 = arith.constant dense<0.000000e+00> : vector<8x8xf32>
    %137 = tpu.matmul %134, %135, %cst_43 {dimension_numbers = #tpu.dot_dimension_numbers<[1], [1], [0], [0], [0, 0, 1, 0], [], []>} : vector<8x8xf32>, vector<8x8xf32>, vector<8x8xf32> -> vector<8x8xf32>
    %138 = arith.addf %137, %101 : vector<8x8xf32>
    %cst_44 = arith.constant dense<0xFF800000> : vector<8xf32>
    %139 = vector.multi_reduction <maximumf>, %138, %cst_44 [1] : vector<8x8xf32> to vector<8xf32>
    %140 = vector.shape_cast %139 : vector<8xf32> to vector<8x1xf32>
    %141 = vector.broadcast %140 : vector<8x1xf32> to vector<8x8xf32>
    %142 = arith.subf %138, %141 : vector<8x8xf32>
    %143 = math.exp %142 : vector<8x8xf32>
    %cst_45 = arith.constant dense<0.000000e+00> : vector<8xf32>
    %144 = vector.multi_reduction <add>, %143, %cst_45 [1] : vector<8x8xf32> to vector<8xf32>
    %145 = vector.shape_cast %144 : vector<8xf32> to vector<8x1xf32>
    %146 = tpu.reciprocal %145 {approx = true} : vector<8x1xf32> -> vector<8x1xf32>
    %147 = vector.broadcast %146 : vector<8x1xf32> to vector<8x8xf32>
    %148 = arith.mulf %143, %147 : vector<8x8xf32>
    %cst_46 = arith.constant dense<0.000000e+00> : vector<8x8xf32>
    %149 = tpu.matmul %148, %136, %cst_46 {dimension_numbers = #tpu.dot_dimension_numbers<[1], [0], [0], [1], [0, 0, 1, 1], [], []>} : vector<8x8xf32>, vector<8x8xf32>, vector<8x8xf32> -> vector<8x8xf32>
    %150 = vector.extract_strided_slice %32 {offsets = [8, 24], sizes = [8, 8], strides = [1, 1]} : vector<16x96xf32> to vector<8x8xf32>
    %151 = vector.extract_strided_slice %32 {offsets = [8, 56], sizes = [8, 8], strides = [1, 1]} : vector<16x96xf32> to vector<8x8xf32>
    %152 = vector.extract_strided_slice %32 {offsets = [8, 88], sizes = [8, 8], strides = [1, 1]} : vector<16x96xf32> to vector<8x8xf32>
    %cst_47 = arith.constant dense<0.000000e+00> : vector<8x8xf32>
    %153 = tpu.matmul %150, %151, %cst_47 {dimension_numbers = #tpu.dot_dimension_numbers<[1], [1], [0], [0], [0, 0, 1, 0], [], []>} : vector<8x8xf32>, vector<8x8xf32>, vector<8x8xf32> -> vector<8x8xf32>
    %154 = arith.addf %153, %101 : vector<8x8xf32>
    %cst_48 = arith.constant dense<0xFF800000> : vector<8xf32>
    %155 = vector.multi_reduction <maximumf>, %154, %cst_48 [1] : vector<8x8xf32> to vector<8xf32>
    %156 = vector.shape_cast %155 : vector<8xf32> to vector<8x1xf32>
    %157 = vector.broadcast %156 : vector<8x1xf32> to vector<8x8xf32>
    %158 = arith.subf %154, %157 : vector<8x8xf32>
    %159 = math.exp %158 : vector<8x8xf32>
    %cst_49 = arith.constant dense<0.000000e+00> : vector<8xf32>
    %160 = vector.multi_reduction <add>, %159, %cst_49 [1] : vector<8x8xf32> to vector<8xf32>
    %161 = vector.shape_cast %160 : vector<8xf32> to vector<8x1xf32>
    %162 = tpu.reciprocal %161 {approx = true} : vector<8x1xf32> -> vector<8x1xf32>
    %163 = vector.broadcast %162 : vector<8x1xf32> to vector<8x8xf32>
    %164 = arith.mulf %159, %163 : vector<8x8xf32>
    %cst_50 = arith.constant dense<0.000000e+00> : vector<8x8xf32>
    %165 = tpu.matmul %164, %152, %cst_50 {dimension_numbers = #tpu.dot_dimension_numbers<[1], [0], [0], [1], [0, 0, 1, 1], [], []>} : vector<8x8xf32>, vector<8x8xf32>, vector<8x8xf32> -> vector<8x8xf32>
    %166 = tpu.concatenate %117, %133, %149, %165 in 1 : vector<8x8xf32>, vector<8x8xf32>, vector<8x8xf32>, vector<8x8xf32> -> vector<8x32xf32>
    %167 = tpu.concatenate %99, %166 in 0 : vector<8x32xf32>, vector<8x32xf32> -> vector<16x32xf32>
    %c0_51 = arith.constant 0 : index
    %c0_52 = arith.constant 0 : index
    %c0_53 = arith.constant 0 : index
    %168 = vector.load %arg6[%c0_51, %c0_52, %c0_53] : memref<2x32x32xf32, #tpu.memory_space<vmem>>, vector<1x32x32xf32>
    %169 = vector.shape_cast %168 : vector<1x32x32xf32> to vector<32x32xf32>
    %cst_54 = arith.constant dense<0.000000e+00> : vector<16x32xf32>
    %170 = tpu.matmul %167, %169, %cst_54 {dimension_numbers = #tpu.dot_dimension_numbers<[1], [0], [0], [1], [0, 0, 1, 1], [], []>} : vector<16x32xf32>, vector<32x32xf32>, vector<16x32xf32> -> vector<16x32xf32>
    %c0_55 = arith.constant 0 : index
    %c0_56 = arith.constant 0 : index
    %c0_57 = arith.constant 0 : index
    %171 = vector.load %arg7[%c0_55, %c0_56, %c0_57] : memref<2x1x32xf32, #tpu.memory_space<vmem>>, vector<1x1x32xf32>
    %172 = vector.shape_cast %171 : vector<1x1x32xf32> to vector<1x32xf32>
    %173 = vector.broadcast %172 : vector<1x32xf32> to vector<16x32xf32>
    %174 = arith.addf %170, %173 : vector<16x32xf32>
    %175 = arith.addf %174, %24 : vector<16x32xf32>
    %c0_58 = arith.constant 0 : index
    %c0_59 = arith.constant 0 : index
    %c0_60 = arith.constant 0 : index
    %176 = vector.load %arg8[%c0_58, %c0_59, %c0_60] : memref<2x1x32xf32, #tpu.memory_space<vmem>>, vector<1x1x32xf32>
    %177 = vector.shape_cast %176 : vector<1x1x32xf32> to vector<1x32xf32>
    %c0_61 = arith.constant 0 : index
    %c0_62 = arith.constant 0 : index
    %c0_63 = arith.constant 0 : index
    %178 = vector.load %arg9[%c0_61, %c0_62, %c0_63] : memref<2x1x32xf32, #tpu.memory_space<vmem>>, vector<1x1x32xf32>
    %179 = vector.shape_cast %178 : vector<1x1x32xf32> to vector<1x32xf32>
    %cst_64 = arith.constant dense<0.000000e+00> : vector<16xf32>
    %180 = vector.multi_reduction <add>, %175, %cst_64 [1] : vector<16x32xf32> to vector<16xf32>
    %181 = vector.shape_cast %180 : vector<16xf32> to vector<16x1xf32>
    %cst_65 = arith.constant 3.200000e+01 : f32
    %182 = vector.broadcast %cst_65 : f32 to vector<16x1xf32>
    %183 = arith.divf %181, %182 : vector<16x1xf32>
    %184 = vector.broadcast %183 : vector<16x1xf32> to vector<16x32xf32>
    %185 = arith.subf %175, %184 : vector<16x32xf32>
    %186 = arith.mulf %185, %185 : vector<16x32xf32>
    %cst_66 = arith.constant dense<0.000000e+00> : vector<16xf32>
    %187 = vector.multi_reduction <add>, %186, %cst_66 [1] : vector<16x32xf32> to vector<16xf32>
    %188 = vector.shape_cast %187 : vector<16xf32> to vector<16x1xf32>
    %cst_67 = arith.constant 3.200000e+01 : f32
    %189 = vector.broadcast %cst_67 : f32 to vector<16x1xf32>
    %190 = arith.divf %188, %189 : vector<16x1xf32>
    %191 = vector.broadcast %183 : vector<16x1xf32> to vector<16x32xf32>
    %192 = arith.subf %175, %191 : vector<16x32xf32>
    %cst_68 = arith.constant 9.99999996E-13 : f32
    %193 = vector.broadcast %cst_68 : f32 to vector<16x1xf32>
    %194 = arith.addf %190, %193 : vector<16x1xf32>
    %195 = math.rsqrt %194 : vector<16x1xf32>
    %196 = vector.broadcast %195 : vector<16x1xf32> to vector<16x32xf32>
    %197 = arith.mulf %192, %196 : vector<16x32xf32>
    %198 = vector.broadcast %177 : vector<1x32xf32> to vector<16x32xf32>
    %199 = arith.mulf %197, %198 : vector<16x32xf32>
    %200 = vector.broadcast %179 : vector<1x32xf32> to vector<16x32xf32>
    %201 = arith.addf %199, %200 : vector<16x32xf32>
    %c0_69 = arith.constant 0 : index
    %c0_70 = arith.constant 0 : index
    %c0_71 = arith.constant 0 : index
    %202 = vector.load %arg10[%c0_69, %c0_70, %c0_71] : memref<2x32x64xf32, #tpu.memory_space<vmem>>, vector<1x32x64xf32>
    %203 = vector.shape_cast %202 : vector<1x32x64xf32> to vector<32x64xf32>
    %cst_72 = arith.constant dense<0.000000e+00> : vector<16x64xf32>
    %204 = tpu.matmul %201, %203, %cst_72 {dimension_numbers = #tpu.dot_dimension_numbers<[1], [0], [0], [1], [0, 0, 1, 1], [], []>} : vector<16x32xf32>, vector<32x64xf32>, vector<16x64xf32> -> vector<16x64xf32>
    %c0_73 = arith.constant 0 : index
    %c0_74 = arith.constant 0 : index
    %c0_75 = arith.constant 0 : index
    %205 = vector.load %arg11[%c0_73, %c0_74, %c0_75] : memref<2x1x64xf32, #tpu.memory_space<vmem>>, vector<1x1x64xf32>
    %206 = vector.shape_cast %205 : vector<1x1x64xf32> to vector<1x64xf32>
    %207 = vector.broadcast %206 : vector<1x64xf32> to vector<16x64xf32>
    %208 = arith.addf %204, %207 : vector<16x64xf32>
    %209 = arith.mulf %208, %208 : vector<16x64xf32>
    %210 = arith.mulf %208, %209 : vector<16x64xf32>
    %cst_76 = arith.constant 4.471500e-02 : f32
    %211 = vector.broadcast %cst_76 : f32 to vector<16x64xf32>
    %212 = arith.mulf %211, %210 : vector<16x64xf32>
    %213 = arith.addf %208, %212 : vector<16x64xf32>
    %cst_77 = arith.constant 0.797884583 : f32
    %214 = vector.broadcast %cst_77 : f32 to vector<16x64xf32>
    %215 = arith.mulf %214, %213 : vector<16x64xf32>
    %216 = math.tanh %215 : vector<16x64xf32>
    %cst_78 = arith.constant 1.000000e+00 : f32
    %217 = vector.broadcast %cst_78 : f32 to vector<16x64xf32>
    %218 = arith.addf %217, %216 : vector<16x64xf32>
    %cst_79 = arith.constant 5.000000e-01 : f32
    %219 = vector.broadcast %cst_79 : f32 to vector<16x64xf32>
    %220 = arith.mulf %219, %218 : vector<16x64xf32>
    %221 = arith.mulf %208, %220 : vector<16x64xf32>
    %c0_80 = arith.constant 0 : index
    %c0_81 = arith.constant 0 : index
    %c0_82 = arith.constant 0 : index
    %222 = vector.load %arg12[%c0_80, %c0_81, %c0_82] : memref<2x64x32xf32, #tpu.memory_space<vmem>>, vector<1x64x32xf32>
    %223 = vector.shape_cast %222 : vector<1x64x32xf32> to vector<64x32xf32>
    %cst_83 = arith.constant dense<0.000000e+00> : vector<16x32xf32>
    %224 = tpu.matmul %221, %223, %cst_83 {dimension_numbers = #tpu.dot_dimension_numbers<[1], [0], [0], [1], [0, 0, 1, 1], [], []>} : vector<16x64xf32>, vector<64x32xf32>, vector<16x32xf32> -> vector<16x32xf32>
    %c0_84 = arith.constant 0 : index
    %c0_85 = arith.constant 0 : index
    %c0_86 = arith.constant 0 : index
    %225 = vector.load %arg13[%c0_84, %c0_85, %c0_86] : memref<2x1x32xf32, #tpu.memory_space<vmem>>, vector<1x1x32xf32>
    %226 = vector.shape_cast %225 : vector<1x1x32xf32> to vector<1x32xf32>
    %227 = vector.broadcast %226 : vector<1x32xf32> to vector<16x32xf32>
    %228 = arith.addf %224, %227 : vector<16x32xf32>
    %229 = arith.addf %228, %201 : vector<16x32xf32>
    %c0_87 = arith.constant 0 : index
    %c0_88 = arith.constant 0 : index
    %c0_89 = arith.constant 0 : index
    %230 = vector.load %arg14[%c0_87, %c0_88, %c0_89] : memref<2x1x32xf32, #tpu.memory_space<vmem>>, vector<1x1x32xf32>
    %231 = vector.shape_cast %230 : vector<1x1x32xf32> to vector<1x32xf32>
    %c0_90 = arith.constant 0 : index
    %c0_91 = arith.constant 0 : index
    %c0_92 = arith.constant 0 : index
    %232 = vector.load %arg15[%c0_90, %c0_91, %c0_92] : memref<2x1x32xf32, #tpu.memory_space<vmem>>, vector<1x1x32xf32>
    %233 = vector.shape_cast %232 : vector<1x1x32xf32> to vector<1x32xf32>
    %cst_93 = arith.constant dense<0.000000e+00> : vector<16xf32>
    %234 = vector.multi_reduction <add>, %229, %cst_93 [1] : vector<16x32xf32> to vector<16xf32>
    %235 = vector.shape_cast %234 : vector<16xf32> to vector<16x1xf32>
    %cst_94 = arith.constant 3.200000e+01 : f32
    %236 = vector.broadcast %cst_94 : f32 to vector<16x1xf32>
    %237 = arith.divf %235, %236 : vector<16x1xf32>
    %238 = vector.broadcast %237 : vector<16x1xf32> to vector<16x32xf32>
    %239 = arith.subf %229, %238 : vector<16x32xf32>
    %240 = arith.mulf %239, %239 : vector<16x32xf32>
    %cst_95 = arith.constant dense<0.000000e+00> : vector<16xf32>
    %241 = vector.multi_reduction <add>, %240, %cst_95 [1] : vector<16x32xf32> to vector<16xf32>
    %242 = vector.shape_cast %241 : vector<16xf32> to vector<16x1xf32>
    %cst_96 = arith.constant 3.200000e+01 : f32
    %243 = vector.broadcast %cst_96 : f32 to vector<16x1xf32>
    %244 = arith.divf %242, %243 : vector<16x1xf32>
    %245 = vector.broadcast %237 : vector<16x1xf32> to vector<16x32xf32>
    %246 = arith.subf %229, %245 : vector<16x32xf32>
    %cst_97 = arith.constant 9.99999996E-13 : f32
    %247 = vector.broadcast %cst_97 : f32 to vector<16x1xf32>
    %248 = arith.addf %244, %247 : vector<16x1xf32>
    %249 = math.rsqrt %248 : vector<16x1xf32>
    %250 = vector.broadcast %249 : vector<16x1xf32> to vector<16x32xf32>
    %251 = arith.mulf %246, %250 : vector<16x32xf32>
    %252 = vector.broadcast %231 : vector<1x32xf32> to vector<16x32xf32>
    %253 = arith.mulf %251, %252 : vector<16x32xf32>
    %254 = vector.broadcast %233 : vector<1x32xf32> to vector<16x32xf32>
    %255 = arith.addf %253, %254 : vector<16x32xf32>
    %c1 = arith.constant 1 : index
    %c0_98 = arith.constant 0 : index
    %c0_99 = arith.constant 0 : index
    %256 = vector.load %arg4[%c1, %c0_98, %c0_99] : memref<2x32x96xf32, #tpu.memory_space<vmem>>, vector<1x32x96xf32>
    %257 = vector.shape_cast %256 : vector<1x32x96xf32> to vector<32x96xf32>
    %cst_100 = arith.constant dense<0.000000e+00> : vector<16x96xf32>
    %258 = tpu.matmul %255, %257, %cst_100 {dimension_numbers = #tpu.dot_dimension_numbers<[1], [0], [0], [1], [0, 0, 1, 1], [], []>} : vector<16x32xf32>, vector<32x96xf32>, vector<16x96xf32> -> vector<16x96xf32>
    %c1_101 = arith.constant 1 : index
    %c0_102 = arith.constant 0 : index
    %c0_103 = arith.constant 0 : index
    %259 = vector.load %arg5[%c1_101, %c0_102, %c0_103] : memref<2x1x96xf32, #tpu.memory_space<vmem>>, vector<1x1x96xf32>
    %260 = vector.shape_cast %259 : vector<1x1x96xf32> to vector<1x96xf32>
    %261 = vector.broadcast %260 : vector<1x96xf32> to vector<16x96xf32>
    %262 = arith.addf %258, %261 : vector<16x96xf32>
    %263 = vector.extract_strided_slice %25 {offsets = [0, 0, 0], sizes = [1, 8, 8], strides = [1, 1, 1]} : vector<2x8x8xf32> to vector<1x8x8xf32>
    %264 = vector.shape_cast %263 : vector<1x8x8xf32> to vector<8x8xf32>
    %265 = vector.extract_strided_slice %262 {offsets = [0, 0], sizes = [8, 8], strides = [1, 1]} : vector<16x96xf32> to vector<8x8xf32>
    %266 = vector.extract_strided_slice %262 {offsets = [0, 32], sizes = [8, 8], strides = [1, 1]} : vector<16x96xf32> to vector<8x8xf32>
    %267 = vector.extract_strided_slice %262 {offsets = [0, 64], sizes = [8, 8], strides = [1, 1]} : vector<16x96xf32> to vector<8x8xf32>
    %cst_104 = arith.constant dense<0.000000e+00> : vector<8x8xf32>
    %268 = tpu.matmul %265, %266, %cst_104 {dimension_numbers = #tpu.dot_dimension_numbers<[1], [1], [0], [0], [0, 0, 1, 0], [], []>} : vector<8x8xf32>, vector<8x8xf32>, vector<8x8xf32> -> vector<8x8xf32>
    %269 = arith.addf %268, %264 : vector<8x8xf32>
    %cst_105 = arith.constant dense<0xFF800000> : vector<8xf32>
    %270 = vector.multi_reduction <maximumf>, %269, %cst_105 [1] : vector<8x8xf32> to vector<8xf32>
    %271 = vector.shape_cast %270 : vector<8xf32> to vector<8x1xf32>
    %272 = vector.broadcast %271 : vector<8x1xf32> to vector<8x8xf32>
    %273 = arith.subf %269, %272 : vector<8x8xf32>
    %274 = math.exp %273 : vector<8x8xf32>
    %cst_106 = arith.constant dense<0.000000e+00> : vector<8xf32>
    %275 = vector.multi_reduction <add>, %274, %cst_106 [1] : vector<8x8xf32> to vector<8xf32>
    %276 = vector.shape_cast %275 : vector<8xf32> to vector<8x1xf32>
    %277 = tpu.reciprocal %276 {approx = true} : vector<8x1xf32> -> vector<8x1xf32>
    %278 = vector.broadcast %277 : vector<8x1xf32> to vector<8x8xf32>
    %279 = arith.mulf %274, %278 : vector<8x8xf32>
    %cst_107 = arith.constant dense<0.000000e+00> : vector<8x8xf32>
    %280 = tpu.matmul %279, %267, %cst_107 {dimension_numbers = #tpu.dot_dimension_numbers<[1], [0], [0], [1], [0, 0, 1, 1], [], []>} : vector<8x8xf32>, vector<8x8xf32>, vector<8x8xf32> -> vector<8x8xf32>
    %281 = vector.extract_strided_slice %262 {offsets = [0, 8], sizes = [8, 8], strides = [1, 1]} : vector<16x96xf32> to vector<8x8xf32>
    %282 = vector.extract_strided_slice %262 {offsets = [0, 40], sizes = [8, 8], strides = [1, 1]} : vector<16x96xf32> to vector<8x8xf32>
    %283 = vector.extract_strided_slice %262 {offsets = [0, 72], sizes = [8, 8], strides = [1, 1]} : vector<16x96xf32> to vector<8x8xf32>
    %cst_108 = arith.constant dense<0.000000e+00> : vector<8x8xf32>
    %284 = tpu.matmul %281, %282, %cst_108 {dimension_numbers = #tpu.dot_dimension_numbers<[1], [1], [0], [0], [0, 0, 1, 0], [], []>} : vector<8x8xf32>, vector<8x8xf32>, vector<8x8xf32> -> vector<8x8xf32>
    %285 = arith.addf %284, %264 : vector<8x8xf32>
    %cst_109 = arith.constant dense<0xFF800000> : vector<8xf32>
    %286 = vector.multi_reduction <maximumf>, %285, %cst_109 [1] : vector<8x8xf32> to vector<8xf32>
    %287 = vector.shape_cast %286 : vector<8xf32> to vector<8x1xf32>
    %288 = vector.broadcast %287 : vector<8x1xf32> to vector<8x8xf32>
    %289 = arith.subf %285, %288 : vector<8x8xf32>
    %290 = math.exp %289 : vector<8x8xf32>
    %cst_110 = arith.constant dense<0.000000e+00> : vector<8xf32>
    %291 = vector.multi_reduction <add>, %290, %cst_110 [1] : vector<8x8xf32> to vector<8xf32>
    %292 = vector.shape_cast %291 : vector<8xf32> to vector<8x1xf32>
    %293 = tpu.reciprocal %292 {approx = true} : vector<8x1xf32> -> vector<8x1xf32>
    %294 = vector.broadcast %293 : vector<8x1xf32> to vector<8x8xf32>
    %295 = arith.mulf %290, %294 : vector<8x8xf32>
    %cst_111 = arith.constant dense<0.000000e+00> : vector<8x8xf32>
    %296 = tpu.matmul %295, %283, %cst_111 {dimension_numbers = #tpu.dot_dimension_numbers<[1], [0], [0], [1], [0, 0, 1, 1], [], []>} : vector<8x8xf32>, vector<8x8xf32>, vector<8x8xf32> -> vector<8x8xf32>
    %297 = vector.extract_strided_slice %262 {offsets = [0, 16], sizes = [8, 8], strides = [1, 1]} : vector<16x96xf32> to vector<8x8xf32>
    %298 = vector.extract_strided_slice %262 {offsets = [0, 48], sizes = [8, 8], strides = [1, 1]} : vector<16x96xf32> to vector<8x8xf32>
    %299 = vector.extract_strided_slice %262 {offsets = [0, 80], sizes = [8, 8], strides = [1, 1]} : vector<16x96xf32> to vector<8x8xf32>
    %cst_112 = arith.constant dense<0.000000e+00> : vector<8x8xf32>
    %300 = tpu.matmul %297, %298, %cst_112 {dimension_numbers = #tpu.dot_dimension_numbers<[1], [1], [0], [0], [0, 0, 1, 0], [], []>} : vector<8x8xf32>, vector<8x8xf32>, vector<8x8xf32> -> vector<8x8xf32>
    %301 = arith.addf %300, %264 : vector<8x8xf32>
    %cst_113 = arith.constant dense<0xFF800000> : vector<8xf32>
    %302 = vector.multi_reduction <maximumf>, %301, %cst_113 [1] : vector<8x8xf32> to vector<8xf32>
    %303 = vector.shape_cast %302 : vector<8xf32> to vector<8x1xf32>
    %304 = vector.broadcast %303 : vector<8x1xf32> to vector<8x8xf32>
    %305 = arith.subf %301, %304 : vector<8x8xf32>
    %306 = math.exp %305 : vector<8x8xf32>
    %cst_114 = arith.constant dense<0.000000e+00> : vector<8xf32>
    %307 = vector.multi_reduction <add>, %306, %cst_114 [1] : vector<8x8xf32> to vector<8xf32>
    %308 = vector.shape_cast %307 : vector<8xf32> to vector<8x1xf32>
    %309 = tpu.reciprocal %308 {approx = true} : vector<8x1xf32> -> vector<8x1xf32>
    %310 = vector.broadcast %309 : vector<8x1xf32> to vector<8x8xf32>
    %311 = arith.mulf %306, %310 : vector<8x8xf32>
    %cst_115 = arith.constant dense<0.000000e+00> : vector<8x8xf32>
    %312 = tpu.matmul %311, %299, %cst_115 {dimension_numbers = #tpu.dot_dimension_numbers<[1], [0], [0], [1], [0, 0, 1, 1], [], []>} : vector<8x8xf32>, vector<8x8xf32>, vector<8x8xf32> -> vector<8x8xf32>
    %313 = vector.extract_strided_slice %262 {offsets = [0, 24], sizes = [8, 8], strides = [1, 1]} : vector<16x96xf32> to vector<8x8xf32>
    %314 = vector.extract_strided_slice %262 {offsets = [0, 56], sizes = [8, 8], strides = [1, 1]} : vector<16x96xf32> to vector<8x8xf32>
    %315 = vector.extract_strided_slice %262 {offsets = [0, 88], sizes = [8, 8], strides = [1, 1]} : vector<16x96xf32> to vector<8x8xf32>
    %cst_116 = arith.constant dense<0.000000e+00> : vector<8x8xf32>
    %316 = tpu.matmul %313, %314, %cst_116 {dimension_numbers = #tpu.dot_dimension_numbers<[1], [1], [0], [0], [0, 0, 1, 0], [], []>} : vector<8x8xf32>, vector<8x8xf32>, vector<8x8xf32> -> vector<8x8xf32>
    %317 = arith.addf %316, %264 : vector<8x8xf32>
    %cst_117 = arith.constant dense<0xFF800000> : vector<8xf32>
    %318 = vector.multi_reduction <maximumf>, %317, %cst_117 [1] : vector<8x8xf32> to vector<8xf32>
    %319 = vector.shape_cast %318 : vector<8xf32> to vector<8x1xf32>
    %320 = vector.broadcast %319 : vector<8x1xf32> to vector<8x8xf32>
    %321 = arith.subf %317, %320 : vector<8x8xf32>
    %322 = math.exp %321 : vector<8x8xf32>
    %cst_118 = arith.constant dense<0.000000e+00> : vector<8xf32>
    %323 = vector.multi_reduction <add>, %322, %cst_118 [1] : vector<8x8xf32> to vector<8xf32>
    %324 = vector.shape_cast %323 : vector<8xf32> to vector<8x1xf32>
    %325 = tpu.reciprocal %324 {approx = true} : vector<8x1xf32> -> vector<8x1xf32>
    %326 = vector.broadcast %325 : vector<8x1xf32> to vector<8x8xf32>
    %327 = arith.mulf %322, %326 : vector<8x8xf32>
    %cst_119 = arith.constant dense<0.000000e+00> : vector<8x8xf32>
    %328 = tpu.matmul %327, %315, %cst_119 {dimension_numbers = #tpu.dot_dimension_numbers<[1], [0], [0], [1], [0, 0, 1, 1], [], []>} : vector<8x8xf32>, vector<8x8xf32>, vector<8x8xf32> -> vector<8x8xf32>
    %329 = tpu.concatenate %280, %296, %312, %328 in 1 : vector<8x8xf32>, vector<8x8xf32>, vector<8x8xf32>, vector<8x8xf32> -> vector<8x32xf32>
    %330 = vector.extract_strided_slice %25 {offsets = [1, 0, 0], sizes = [1, 8, 8], strides = [1, 1, 1]} : vector<2x8x8xf32> to vector<1x8x8xf32>
    %331 = vector.shape_cast %330 : vector<1x8x8xf32> to vector<8x8xf32>
    %332 = vector.extract_strided_slice %262 {offsets = [8, 0], sizes = [8, 8], strides = [1, 1]} : vector<16x96xf32> to vector<8x8xf32>
    %333 = vector.extract_strided_slice %262 {offsets = [8, 32], sizes = [8, 8], strides = [1, 1]} : vector<16x96xf32> to vector<8x8xf32>
    %334 = vector.extract_strided_slice %262 {offsets = [8, 64], sizes = [8, 8], strides = [1, 1]} : vector<16x96xf32> to vector<8x8xf32>
    %cst_120 = arith.constant dense<0.000000e+00> : vector<8x8xf32>
    %335 = tpu.matmul %332, %333, %cst_120 {dimension_numbers = #tpu.dot_dimension_numbers<[1], [1], [0], [0], [0, 0, 1, 0], [], []>} : vector<8x8xf32>, vector<8x8xf32>, vector<8x8xf32> -> vector<8x8xf32>
    %336 = arith.addf %335, %331 : vector<8x8xf32>
    %cst_121 = arith.constant dense<0xFF800000> : vector<8xf32>
    %337 = vector.multi_reduction <maximumf>, %336, %cst_121 [1] : vector<8x8xf32> to vector<8xf32>
    %338 = vector.shape_cast %337 : vector<8xf32> to vector<8x1xf32>
    %339 = vector.broadcast %338 : vector<8x1xf32> to vector<8x8xf32>
    %340 = arith.subf %336, %339 : vector<8x8xf32>
    %341 = math.exp %340 : vector<8x8xf32>
    %cst_122 = arith.constant dense<0.000000e+00> : vector<8xf32>
    %342 = vector.multi_reduction <add>, %341, %cst_122 [1] : vector<8x8xf32> to vector<8xf32>
    %343 = vector.shape_cast %342 : vector<8xf32> to vector<8x1xf32>
    %344 = tpu.reciprocal %343 {approx = true} : vector<8x1xf32> -> vector<8x1xf32>
    %345 = vector.broadcast %344 : vector<8x1xf32> to vector<8x8xf32>
    %346 = arith.mulf %341, %345 : vector<8x8xf32>
    %cst_123 = arith.constant dense<0.000000e+00> : vector<8x8xf32>
    %347 = tpu.matmul %346, %334, %cst_123 {dimension_numbers = #tpu.dot_dimension_numbers<[1], [0], [0], [1], [0, 0, 1, 1], [], []>} : vector<8x8xf32>, vector<8x8xf32>, vector<8x8xf32> -> vector<8x8xf32>
    %348 = vector.extract_strided_slice %262 {offsets = [8, 8], sizes = [8, 8], strides = [1, 1]} : vector<16x96xf32> to vector<8x8xf32>
    %349 = vector.extract_strided_slice %262 {offsets = [8, 40], sizes = [8, 8], strides = [1, 1]} : vector<16x96xf32> to vector<8x8xf32>
    %350 = vector.extract_strided_slice %262 {offsets = [8, 72], sizes = [8, 8], strides = [1, 1]} : vector<16x96xf32> to vector<8x8xf32>
    %cst_124 = arith.constant dense<0.000000e+00> : vector<8x8xf32>
    %351 = tpu.matmul %348, %349, %cst_124 {dimension_numbers = #tpu.dot_dimension_numbers<[1], [1], [0], [0], [0, 0, 1, 0], [], []>} : vector<8x8xf32>, vector<8x8xf32>, vector<8x8xf32> -> vector<8x8xf32>
    %352 = arith.addf %351, %331 : vector<8x8xf32>
    %cst_125 = arith.constant dense<0xFF800000> : vector<8xf32>
    %353 = vector.multi_reduction <maximumf>, %352, %cst_125 [1] : vector<8x8xf32> to vector<8xf32>
    %354 = vector.shape_cast %353 : vector<8xf32> to vector<8x1xf32>
    %355 = vector.broadcast %354 : vector<8x1xf32> to vector<8x8xf32>
    %356 = arith.subf %352, %355 : vector<8x8xf32>
    %357 = math.exp %356 : vector<8x8xf32>
    %cst_126 = arith.constant dense<0.000000e+00> : vector<8xf32>
    %358 = vector.multi_reduction <add>, %357, %cst_126 [1] : vector<8x8xf32> to vector<8xf32>
    %359 = vector.shape_cast %358 : vector<8xf32> to vector<8x1xf32>
    %360 = tpu.reciprocal %359 {approx = true} : vector<8x1xf32> -> vector<8x1xf32>
    %361 = vector.broadcast %360 : vector<8x1xf32> to vector<8x8xf32>
    %362 = arith.mulf %357, %361 : vector<8x8xf32>
    %cst_127 = arith.constant dense<0.000000e+00> : vector<8x8xf32>
    %363 = tpu.matmul %362, %350, %cst_127 {dimension_numbers = #tpu.dot_dimension_numbers<[1], [0], [0], [1], [0, 0, 1, 1], [], []>} : vector<8x8xf32>, vector<8x8xf32>, vector<8x8xf32> -> vector<8x8xf32>
    %364 = vector.extract_strided_slice %262 {offsets = [8, 16], sizes = [8, 8], strides = [1, 1]} : vector<16x96xf32> to vector<8x8xf32>
    %365 = vector.extract_strided_slice %262 {offsets = [8, 48], sizes = [8, 8], strides = [1, 1]} : vector<16x96xf32> to vector<8x8xf32>
    %366 = vector.extract_strided_slice %262 {offsets = [8, 80], sizes = [8, 8], strides = [1, 1]} : vector<16x96xf32> to vector<8x8xf32>
    %cst_128 = arith.constant dense<0.000000e+00> : vector<8x8xf32>
    %367 = tpu.matmul %364, %365, %cst_128 {dimension_numbers = #tpu.dot_dimension_numbers<[1], [1], [0], [0], [0, 0, 1, 0], [], []>} : vector<8x8xf32>, vector<8x8xf32>, vector<8x8xf32> -> vector<8x8xf32>
    %368 = arith.addf %367, %331 : vector<8x8xf32>
    %cst_129 = arith.constant dense<0xFF800000> : vector<8xf32>
    %369 = vector.multi_reduction <maximumf>, %368, %cst_129 [1] : vector<8x8xf32> to vector<8xf32>
    %370 = vector.shape_cast %369 : vector<8xf32> to vector<8x1xf32>
    %371 = vector.broadcast %370 : vector<8x1xf32> to vector<8x8xf32>
    %372 = arith.subf %368, %371 : vector<8x8xf32>
    %373 = math.exp %372 : vector<8x8xf32>
    %cst_130 = arith.constant dense<0.000000e+00> : vector<8xf32>
    %374 = vector.multi_reduction <add>, %373, %cst_130 [1] : vector<8x8xf32> to vector<8xf32>
    %375 = vector.shape_cast %374 : vector<8xf32> to vector<8x1xf32>
    %376 = tpu.reciprocal %375 {approx = true} : vector<8x1xf32> -> vector<8x1xf32>
    %377 = vector.broadcast %376 : vector<8x1xf32> to vector<8x8xf32>
    %378 = arith.mulf %373, %377 : vector<8x8xf32>
    %cst_131 = arith.constant dense<0.000000e+00> : vector<8x8xf32>
    %379 = tpu.matmul %378, %366, %cst_131 {dimension_numbers = #tpu.dot_dimension_numbers<[1], [0], [0], [1], [0, 0, 1, 1], [], []>} : vector<8x8xf32>, vector<8x8xf32>, vector<8x8xf32> -> vector<8x8xf32>
    %380 = vector.extract_strided_slice %262 {offsets = [8, 24], sizes = [8, 8], strides = [1, 1]} : vector<16x96xf32> to vector<8x8xf32>
    %381 = vector.extract_strided_slice %262 {offsets = [8, 56], sizes = [8, 8], strides = [1, 1]} : vector<16x96xf32> to vector<8x8xf32>
    %382 = vector.extract_strided_slice %262 {offsets = [8, 88], sizes = [8, 8], strides = [1, 1]} : vector<16x96xf32> to vector<8x8xf32>
    %cst_132 = arith.constant dense<0.000000e+00> : vector<8x8xf32>
    %383 = tpu.matmul %380, %381, %cst_132 {dimension_numbers = #tpu.dot_dimension_numbers<[1], [1], [0], [0], [0, 0, 1, 0], [], []>} : vector<8x8xf32>, vector<8x8xf32>, vector<8x8xf32> -> vector<8x8xf32>
    %384 = arith.addf %383, %331 : vector<8x8xf32>
    %cst_133 = arith.constant dense<0xFF800000> : vector<8xf32>
    %385 = vector.multi_reduction <maximumf>, %384, %cst_133 [1] : vector<8x8xf32> to vector<8xf32>
    %386 = vector.shape_cast %385 : vector<8xf32> to vector<8x1xf32>
    %387 = vector.broadcast %386 : vector<8x1xf32> to vector<8x8xf32>
    %388 = arith.subf %384, %387 : vector<8x8xf32>
    %389 = math.exp %388 : vector<8x8xf32>
    %cst_134 = arith.constant dense<0.000000e+00> : vector<8xf32>
    %390 = vector.multi_reduction <add>, %389, %cst_134 [1] : vector<8x8xf32> to vector<8xf32>
    %391 = vector.shape_cast %390 : vector<8xf32> to vector<8x1xf32>
    %392 = tpu.reciprocal %391 {approx = true} : vector<8x1xf32> -> vector<8x1xf32>
    %393 = vector.broadcast %392 : vector<8x1xf32> to vector<8x8xf32>
    %394 = arith.mulf %389, %393 : vector<8x8xf32>
    %cst_135 = arith.constant dense<0.000000e+00> : vector<8x8xf32>
    %395 = tpu.matmul %394, %382, %cst_135 {dimension_numbers = #tpu.dot_dimension_numbers<[1], [0], [0], [1], [0, 0, 1, 1], [], []>} : vector<8x8xf32>, vector<8x8xf32>, vector<8x8xf32> -> vector<8x8xf32>
    %396 = tpu.concatenate %347, %363, %379, %395 in 1 : vector<8x8xf32>, vector<8x8xf32>, vector<8x8xf32>, vector<8x8xf32> -> vector<8x32xf32>
    %397 = tpu.concatenate %329, %396 in 0 : vector<8x32xf32>, vector<8x32xf32> -> vector<16x32xf32>
    %c1_136 = arith.constant 1 : index
    %c0_137 = arith.constant 0 : index
    %c0_138 = arith.constant 0 : index
    %398 = vector.load %arg6[%c1_136, %c0_137, %c0_138] : memref<2x32x32xf32, #tpu.memory_space<vmem>>, vector<1x32x32xf32>
    %399 = vector.shape_cast %398 : vector<1x32x32xf32> to vector<32x32xf32>
    %cst_139 = arith.constant dense<0.000000e+00> : vector<16x32xf32>
    %400 = tpu.matmul %397, %399, %cst_139 {dimension_numbers = #tpu.dot_dimension_numbers<[1], [0], [0], [1], [0, 0, 1, 1], [], []>} : vector<16x32xf32>, vector<32x32xf32>, vector<16x32xf32> -> vector<16x32xf32>
    %c1_140 = arith.constant 1 : index
    %c0_141 = arith.constant 0 : index
    %c0_142 = arith.constant 0 : index
    %401 = vector.load %arg7[%c1_140, %c0_141, %c0_142] : memref<2x1x32xf32, #tpu.memory_space<vmem>>, vector<1x1x32xf32>
    %402 = vector.shape_cast %401 : vector<1x1x32xf32> to vector<1x32xf32>
    %403 = vector.broadcast %402 : vector<1x32xf32> to vector<16x32xf32>
    %404 = arith.addf %400, %403 : vector<16x32xf32>
    %405 = arith.addf %404, %255 : vector<16x32xf32>
    %c1_143 = arith.constant 1 : index
    %c0_144 = arith.constant 0 : index
    %c0_145 = arith.constant 0 : index
    %406 = vector.load %arg8[%c1_143, %c0_144, %c0_145] : memref<2x1x32xf32, #tpu.memory_space<vmem>>, vector<1x1x32xf32>
    %407 = vector.shape_cast %406 : vector<1x1x32xf32> to vector<1x32xf32>
    %c1_146 = arith.constant 1 : index
    %c0_147 = arith.constant 0 : index
    %c0_148 = arith.constant 0 : index
    %408 = vector.load %arg9[%c1_146, %c0_147, %c0_148] : memref<2x1x32xf32, #tpu.memory_space<vmem>>, vector<1x1x32xf32>
    %409 = vector.shape_cast %408 : vector<1x1x32xf32> to vector<1x32xf32>
    %cst_149 = arith.constant dense<0.000000e+00> : vector<16xf32>
    %410 = vector.multi_reduction <add>, %405, %cst_149 [1] : vector<16x32xf32> to vector<16xf32>
    %411 = vector.shape_cast %410 : vector<16xf32> to vector<16x1xf32>
    %cst_150 = arith.constant 3.200000e+01 : f32
    %412 = vector.broadcast %cst_150 : f32 to vector<16x1xf32>
    %413 = arith.divf %411, %412 : vector<16x1xf32>
    %414 = vector.broadcast %413 : vector<16x1xf32> to vector<16x32xf32>
    %415 = arith.subf %405, %414 : vector<16x32xf32>
    %416 = arith.mulf %415, %415 : vector<16x32xf32>
    %cst_151 = arith.constant dense<0.000000e+00> : vector<16xf32>
    %417 = vector.multi_reduction <add>, %416, %cst_151 [1] : vector<16x32xf32> to vector<16xf32>
    %418 = vector.shape_cast %417 : vector<16xf32> to vector<16x1xf32>
    %cst_152 = arith.constant 3.200000e+01 : f32
    %419 = vector.broadcast %cst_152 : f32 to vector<16x1xf32>
    %420 = arith.divf %418, %419 : vector<16x1xf32>
    %421 = vector.broadcast %413 : vector<16x1xf32> to vector<16x32xf32>
    %422 = arith.subf %405, %421 : vector<16x32xf32>
    %cst_153 = arith.constant 9.99999996E-13 : f32
    %423 = vector.broadcast %cst_153 : f32 to vector<16x1xf32>
    %424 = arith.addf %420, %423 : vector<16x1xf32>
    %425 = math.rsqrt %424 : vector<16x1xf32>
    %426 = vector.broadcast %425 : vector<16x1xf32> to vector<16x32xf32>
    %427 = arith.mulf %422, %426 : vector<16x32xf32>
    %428 = vector.broadcast %407 : vector<1x32xf32> to vector<16x32xf32>
    %429 = arith.mulf %427, %428 : vector<16x32xf32>
    %430 = vector.broadcast %409 : vector<1x32xf32> to vector<16x32xf32>
    %431 = arith.addf %429, %430 : vector<16x32xf32>
    %c1_154 = arith.constant 1 : index
    %c0_155 = arith.constant 0 : index
    %c0_156 = arith.constant 0 : index
    %432 = vector.load %arg10[%c1_154, %c0_155, %c0_156] : memref<2x32x64xf32, #tpu.memory_space<vmem>>, vector<1x32x64xf32>
    %433 = vector.shape_cast %432 : vector<1x32x64xf32> to vector<32x64xf32>
    %cst_157 = arith.constant dense<0.000000e+00> : vector<16x64xf32>
    %434 = tpu.matmul %431, %433, %cst_157 {dimension_numbers = #tpu.dot_dimension_numbers<[1], [0], [0], [1], [0, 0, 1, 1], [], []>} : vector<16x32xf32>, vector<32x64xf32>, vector<16x64xf32> -> vector<16x64xf32>
    %c1_158 = arith.constant 1 : index
    %c0_159 = arith.constant 0 : index
    %c0_160 = arith.constant 0 : index
    %435 = vector.load %arg11[%c1_158, %c0_159, %c0_160] : memref<2x1x64xf32, #tpu.memory_space<vmem>>, vector<1x1x64xf32>
    %436 = vector.shape_cast %435 : vector<1x1x64xf32> to vector<1x64xf32>
    %437 = vector.broadcast %436 : vector<1x64xf32> to vector<16x64xf32>
    %438 = arith.addf %434, %437 : vector<16x64xf32>
    %439 = arith.mulf %438, %438 : vector<16x64xf32>
    %440 = arith.mulf %438, %439 : vector<16x64xf32>
    %cst_161 = arith.constant 4.471500e-02 : f32
    %441 = vector.broadcast %cst_161 : f32 to vector<16x64xf32>
    %442 = arith.mulf %441, %440 : vector<16x64xf32>
    %443 = arith.addf %438, %442 : vector<16x64xf32>
    %cst_162 = arith.constant 0.797884583 : f32
    %444 = vector.broadcast %cst_162 : f32 to vector<16x64xf32>
    %445 = arith.mulf %444, %443 : vector<16x64xf32>
    %446 = math.tanh %445 : vector<16x64xf32>
    %cst_163 = arith.constant 1.000000e+00 : f32
    %447 = vector.broadcast %cst_163 : f32 to vector<16x64xf32>
    %448 = arith.addf %447, %446 : vector<16x64xf32>
    %cst_164 = arith.constant 5.000000e-01 : f32
    %449 = vector.broadcast %cst_164 : f32 to vector<16x64xf32>
    %450 = arith.mulf %449, %448 : vector<16x64xf32>
    %451 = arith.mulf %438, %450 : vector<16x64xf32>
    %c1_165 = arith.constant 1 : index
    %c0_166 = arith.constant 0 : index
    %c0_167 = arith.constant 0 : index
    %452 = vector.load %arg12[%c1_165, %c0_166, %c0_167] : memref<2x64x32xf32, #tpu.memory_space<vmem>>, vector<1x64x32xf32>
    %453 = vector.shape_cast %452 : vector<1x64x32xf32> to vector<64x32xf32>
    %cst_168 = arith.constant dense<0.000000e+00> : vector<16x32xf32>
    %454 = tpu.matmul %451, %453, %cst_168 {dimension_numbers = #tpu.dot_dimension_numbers<[1], [0], [0], [1], [0, 0, 1, 1], [], []>} : vector<16x64xf32>, vector<64x32xf32>, vector<16x32xf32> -> vector<16x32xf32>
    %c1_169 = arith.constant 1 : index
    %c0_170 = arith.constant 0 : index
    %c0_171 = arith.constant 0 : index
    %455 = vector.load %arg13[%c1_169, %c0_170, %c0_171] : memref<2x1x32xf32, #tpu.memory_space<vmem>>, vector<1x1x32xf32>
    %456 = vector.shape_cast %455 : vector<1x1x32xf32> to vector<1x32xf32>
    %457 = vector.broadcast %456 : vector<1x32xf32> to vector<16x32xf32>
    %458 = arith.addf %454, %457 : vector<16x32xf32>
    %459 = arith.addf %458, %431 : vector<16x32xf32>
    %c1_172 = arith.constant 1 : index
    %c0_173 = arith.constant 0 : index
    %c0_174 = arith.constant 0 : index
    %460 = vector.load %arg14[%c1_172, %c0_173, %c0_174] : memref<2x1x32xf32, #tpu.memory_space<vmem>>, vector<1x1x32xf32>
    %461 = vector.shape_cast %460 : vector<1x1x32xf32> to vector<1x32xf32>
    %c1_175 = arith.constant 1 : index
    %c0_176 = arith.constant 0 : index
    %c0_177 = arith.constant 0 : index
    %462 = vector.load %arg15[%c1_175, %c0_176, %c0_177] : memref<2x1x32xf32, #tpu.memory_space<vmem>>, vector<1x1x32xf32>
    %463 = vector.shape_cast %462 : vector<1x1x32xf32> to vector<1x32xf32>
    %cst_178 = arith.constant dense<0.000000e+00> : vector<16xf32>
    %464 = vector.multi_reduction <add>, %459, %cst_178 [1] : vector<16x32xf32> to vector<16xf32>
    %465 = vector.shape_cast %464 : vector<16xf32> to vector<16x1xf32>
    %cst_179 = arith.constant 3.200000e+01 : f32
    %466 = vector.broadcast %cst_179 : f32 to vector<16x1xf32>
    %467 = arith.divf %465, %466 : vector<16x1xf32>
    %468 = vector.broadcast %467 : vector<16x1xf32> to vector<16x32xf32>
    %469 = arith.subf %459, %468 : vector<16x32xf32>
    %470 = arith.mulf %469, %469 : vector<16x32xf32>
    %cst_180 = arith.constant dense<0.000000e+00> : vector<16xf32>
    %471 = vector.multi_reduction <add>, %470, %cst_180 [1] : vector<16x32xf32> to vector<16xf32>
    %472 = vector.shape_cast %471 : vector<16xf32> to vector<16x1xf32>
    %cst_181 = arith.constant 3.200000e+01 : f32
    %473 = vector.broadcast %cst_181 : f32 to vector<16x1xf32>
    %474 = arith.divf %472, %473 : vector<16x1xf32>
    %475 = vector.broadcast %467 : vector<16x1xf32> to vector<16x32xf32>
    %476 = arith.subf %459, %475 : vector<16x32xf32>
    %cst_182 = arith.constant 9.99999996E-13 : f32
    %477 = vector.broadcast %cst_182 : f32 to vector<16x1xf32>
    %478 = arith.addf %474, %477 : vector<16x1xf32>
    %479 = math.rsqrt %478 : vector<16x1xf32>
    %480 = vector.broadcast %479 : vector<16x1xf32> to vector<16x32xf32>
    %481 = arith.mulf %476, %480 : vector<16x32xf32>
    %482 = vector.broadcast %461 : vector<1x32xf32> to vector<16x32xf32>
    %483 = arith.mulf %481, %482 : vector<16x32xf32>
    %484 = vector.broadcast %463 : vector<1x32xf32> to vector<16x32xf32>
    %485 = arith.addf %483, %484 : vector<16x32xf32>
    %486 = vector.extract_strided_slice %485 {offsets = [0, 0], sizes = [1, 32], strides = [1, 1]} : vector<16x32xf32> to vector<1x32xf32>
    %487 = vector.extract_strided_slice %485 {offsets = [8, 0], sizes = [1, 32], strides = [1, 1]} : vector<16x32xf32> to vector<1x32xf32>
    %488 = tpu.concatenate %486, %487 in 0 : vector<1x32xf32>, vector<1x32xf32> -> vector<2x32xf32>
    %c0_183 = arith.constant 0 : index
    %c0_184 = arith.constant 0 : index
    %489 = vector.load %arg16[%c0_183, %c0_184] : memref<32x32xf32, #tpu.memory_space<vmem>>, vector<32x32xf32>
    %cst_185 = arith.constant dense<0.000000e+00> : vector<2x32xf32>
    %490 = tpu.matmul %488, %489, %cst_185 {dimension_numbers = #tpu.dot_dimension_numbers<[1], [0], [0], [1], [0, 0, 1, 1], [], []>} : vector<2x32xf32>, vector<32x32xf32>, vector<2x32xf32> -> vector<2x32xf32>
    %c0_186 = arith.constant 0 : index
    %c0_187 = arith.constant 0 : index
    %491 = vector.load %arg17[%c0_186, %c0_187] : memref<1x32xf32, #tpu.memory_space<vmem>>, vector<1x32xf32>
    %492 = vector.broadcast %491 : vector<1x32xf32> to vector<2x32xf32>
    %493 = arith.addf %490, %492 : vector<2x32xf32>
    %494 = math.tanh %493 : vector<2x32xf32>
    %c0_188 = arith.constant 0 : index
    %c0_189 = arith.constant 0 : index
    %495 = vector.load %arg18[%c0_188, %c0_189] : memref<32x128xf32, #tpu.memory_space<vmem>>, vector<32x128xf32>
    %cst_190 = arith.constant dense<0.000000e+00> : vector<2x128xf32>
    %496 = tpu.matmul %494, %495, %cst_190 {dimension_numbers = #tpu.dot_dimension_numbers<[1], [0], [0], [1], [0, 0, 1, 1], [], []>} : vector<2x32xf32>, vector<32x128xf32>, vector<2x128xf32> -> vector<2x128xf32>
    %c0_191 = arith.constant 0 : index
    %c0_192 = arith.constant 0 : index
    %497 = vector.load %arg19[%c0_191, %c0_192] : memref<1x128xf32, #tpu.memory_space<vmem>>, vector<1x128xf32>
    %498 = vector.broadcast %497 : vector<1x128xf32> to vector<2x128xf32>
    %499 = arith.addf %496, %498 : vector<2x128xf32>
    %c0_193 = arith.constant 0 : index
    %c0_194 = arith.constant 0 : index
    %500 = vector.load %arg20[%c0_193, %c0_194] : memref<2x128xf32, #tpu.memory_space<vmem>>, vector<2x128xf32>
    tpu.vector_store %arg20[%c0_193, %c0_194], %499 {strides = array<i32>} : memref<2x128xf32, #tpu.memory_space<vmem>>, vector<2x128xf32>,
    return
  }
}

</mosaic_0001>

<llo_original>
// kernel: bert_model_1_forward.1
$region0: #{bert_model_1_forward.1}
  #allocation0 [shape = 'u32[]', space=smem, size = 0x4, offset = 0x4, fixed_abs, tag = 'smem constant byte address 0x4 - core index']
  #allocation1 [shape = 'u32[72,128]{1,0:T(1,128)}', space=vmem, size = 0x9000, scoped, tag = 'internal scratch']
  %s0 = inlined_call_operand.vmem [shape: f32[16,32], index: 0, kind: input, shape index: {}]
  %s1 = inlined_call_operand.vmem [shape: f32[2,8,8], index: 1, kind: input, shape index: {}]
  %s2 = inlined_call_operand.vmem [shape: f32[1,32], index: 2, kind: input, shape index: {}]
  %s3 = inlined_call_operand.vmem [shape: f32[1,32], index: 3, kind: input, shape index: {}]
  %s4 = inlined_call_operand.vmem [shape: f32[2,32,96], index: 4, kind: input, shape index: {}]
  %s5 = inlined_call_operand.vmem [shape: f32[2,1,96], index: 5, kind: input, shape index: {}]
  %s6 = inlined_call_operand.vmem [shape: f32[2,32,32], index: 6, kind: input, shape index: {}]
  %s7 = inlined_call_operand.vmem [shape: f32[2,1,32], index: 7, kind: input, shape index: {}]
  %s8 = inlined_call_operand.vmem [shape: f32[2,1,32], index: 8, kind: input, shape index: {}]
  %s9 = inlined_call_operand.vmem [shape: f32[2,1,32], index: 9, kind: input, shape index: {}]
  %s10 = inlined_call_operand.vmem [shape: f32[2,32,64], index: 10, kind: input, shape index: {}]
  %s11 = inlined_call_operand.vmem [shape: f32[2,1,64], index: 11, kind: input, shape index: {}]
  %s12 = inlined_call_operand.vmem [shape: f32[2,64,32], index: 12, kind: input, shape index: {}]
  %s13 = inlined_call_operand.vmem [shape: f32[2,1,32], index: 13, kind: input, shape index: {}]
  %s14 = inlined_call_operand.vmem [shape: f32[2,1,32], index: 14, kind: input, shape index: {}]
  %s15 = inlined_call_operand.vmem [shape: f32[2,1,32], index: 15, kind: input, shape index: {}]
  %s16 = inlined_call_operand.vmem [shape: f32[32,32], index: 16, kind: input, shape index: {}]
  %s17 = inlined_call_operand.vmem [shape: f32[1,32], index: 17, kind: input, shape index: {}]
  %s18 = inlined_call_operand.vmem [shape: f32[32,128], index: 18, kind: input, shape index: {}]
  %s19 = inlined_call_operand.vmem [shape: f32[1,128], index: 19, kind: input, shape index: {}]
  %s20 = inlined_call_operand.hbm [shape: f32[2,128], index: 20, kind: output, shape index: {}]
  %s21 = sld [smem:[#allocation0]]
  $region90: #{bert_model_1_forward.1} parent=0
    _
  %s23 = ssub.s32 1, %s21
  %s24 = scalar_select 0, %s23, %s21
  $region1: #{bert_model_1_forward.1} parent=0
    #allocation2 [shape = 'u8[1024]{0}', space=vmem, size = 0x400, scoped, tag = 'output window, operand 0, single buffered']
    #allocation3 [shape = 's32[1]{0}', space=sflag, size = 0x4, scoped, tag = 'scoped memory for bert_model_1_forward.1']
    %25 = vsyncpa [#allocation3], 0
    // Predicated region
    $region2: #{bert_model_1_forward.1} parent=1 // pred_check
      _
    $region3: #{bert_model_1_forward.1} parent=1 // pred_check_branch
      %27 = sbr.rel (0) target = $region5
    $region4: #{bert_model_1_forward.1} parent=1 // pred_region
      _
    $region5: #{bert_model_1_forward.1} parent=1 // pred_fallthru
      _
    // Predicated region
    $region6: #{bert_model_1_forward.1} parent=1 // pred_check
      _
    $region7: #{bert_model_1_forward.1} parent=1 // pred_check_branch
      %29 = sbr.rel (0) target = $region9
    $region8: #{bert_model_1_forward.1} parent=1 // pred_region
      _
    $region9: #{bert_model_1_forward.1} parent=1 // pred_fallthru
      _
    // Predicated region
    $region10: #{bert_model_1_forward.1} parent=1 // pred_check
      _
    $region11: #{bert_model_1_forward.1} parent=1 // pred_check_branch
      %31 = sbr.rel (0) target = $region13
    $region12: #{bert_model_1_forward.1} parent=1 // pred_region
      _
    $region13: #{bert_model_1_forward.1} parent=1 // pred_fallthru
      _
    // Predicated region
    $region14: #{bert_model_1_forward.1} parent=1 // pred_check
      _
    $region15: #{bert_model_1_forward.1} parent=1 // pred_check_branch
      %33 = sbr.rel (0) target = $region17
    $region16: #{bert_model_1_forward.1} parent=1 // pred_region
      _
    $region17: #{bert_model_1_forward.1} parent=1 // pred_fallthru
      _
    // Predicated region
    $region18: #{bert_model_1_forward.1} parent=1 // pred_check
      _
    $region19: #{bert_model_1_forward.1} parent=1 // pred_check_branch
      %35 = sbr.rel (0) target = $region21
    $region20: #{bert_model_1_forward.1} parent=1 // pred_region
      _
    $region21: #{bert_model_1_forward.1} parent=1 // pred_fallthru
      _
    // Predicated region
    $region22: #{bert_model_1_forward.1} parent=1 // pred_check
      _
    $region23: #{bert_model_1_forward.1} parent=1 // pred_check_branch
      %37 = sbr.rel (0) target = $region25
    $region24: #{bert_model_1_forward.1} parent=1 // pred_region
      _
    $region25: #{bert_model_1_forward.1} parent=1 // pred_fallthru
      _
    // Predicated region
    $region26: #{bert_model_1_forward.1} parent=1 // pred_check
      _
    $region27: #{bert_model_1_forward.1} parent=1 // pred_check_branch
      %39 = sbr.rel (0) target = $region29
    $region28: #{bert_model_1_forward.1} parent=1 // pred_region
      _
    $region29: #{bert_model_1_forward.1} parent=1 // pred_fallthru
      _
    // Predicated region
    $region30: #{bert_model_1_forward.1} parent=1 // pred_check
      _
    $region31: #{bert_model_1_forward.1} parent=1 // pred_check_branch
      %41 = sbr.rel (0) target = $region33
    $region32: #{bert_model_1_forward.1} parent=1 // pred_region
      _
    $region33: #{bert_model_1_forward.1} parent=1 // pred_fallthru
      _
    // Predicated region
    $region34: #{bert_model_1_forward.1} parent=1 // pred_check
      _
    $region35: #{bert_model_1_forward.1} parent=1 // pred_check_branch
      %43 = sbr.rel (0) target = $region37
    $region36: #{bert_model_1_forward.1} parent=1 // pred_region
      _
    $region37: #{bert_model_1_forward.1} parent=1 // pred_fallthru
      _
    // Predicated region
    $region38: #{bert_model_1_forward.1} parent=1 // pred_check
      _
    $region39: #{bert_model_1_forward.1} parent=1 // pred_check_branch
      %45 = sbr.rel (0) target = $region41
    $region40: #{bert_model_1_forward.1} parent=1 // pred_region
      _
    $region41: #{bert_model_1_forward.1} parent=1 // pred_fallthru
      _
    // Predicated region
    $region42: #{bert_model_1_forward.1} parent=1 // pred_check
      _
    $region43: #{bert_model_1_forward.1} parent=1 // pred_check_branch
      %47 = sbr.rel (0) target = $region45
    $region44: #{bert_model_1_forward.1} parent=1 // pred_region
      _
    $region45: #{bert_model_1_forward.1} parent=1 // pred_fallthru
      _
    // Predicated region
    $region46: #{bert_model_1_forward.1} parent=1 // pred_check
      _
    $region47: #{bert_model_1_forward.1} parent=1 // pred_check_branch
      %49 = sbr.rel (0) target = $region49
    $region48: #{bert_model_1_forward.1} parent=1 // pred_region
      _
    $region49: #{bert_model_1_forward.1} parent=1 // pred_fallthru
      _
    // Predicated region
    $region50: #{bert_model_1_forward.1} parent=1 // pred_check
      _
    $region51: #{bert_model_1_forward.1} parent=1 // pred_check_branch
      %51 = sbr.rel (0) target = $region53
    $region52: #{bert_model_1_forward.1} parent=1 // pred_region
      _
    $region53: #{bert_model_1_forward.1} parent=1 // pred_fallthru
      _
    // Predicated region
    $region54: #{bert_model_1_forward.1} parent=1 // pred_check
      _
    $region55: #{bert_model_1_forward.1} parent=1 // pred_check_branch
      %53 = sbr.rel (0) target = $region57
    $region56: #{bert_model_1_forward.1} parent=1 // pred_region
      _
    $region57: #{bert_model_1_forward.1} parent=1 // pred_fallthru
      _
    // Predicated region
    $region58: #{bert_model_1_forward.1} parent=1 // pred_check
      _
    $region59: #{bert_model_1_forward.1} parent=1 // pred_check_branch
      %55 = sbr.rel (0) target = $region61
    $region60: #{bert_model_1_forward.1} parent=1 // pred_region
      _
    $region61: #{bert_model_1_forward.1} parent=1 // pred_fallthru
      _
    // Predicated region
    $region62: #{bert_model_1_forward.1} parent=1 // pred_check
      _
    $region63: #{bert_model_1_forward.1} parent=1 // pred_check_branch
      %57 = sbr.rel (0) target = $region65
    $region64: #{bert_model_1_forward.1} parent=1 // pred_region
      _
    $region65: #{bert_model_1_forward.1} parent=1 // pred_fallthru
      _
    // Predicated region
    $region66: #{bert_model_1_forward.1} parent=1 // pred_check
      _
    $region67: #{bert_model_1_forward.1} parent=1 // pred_check_branch
      %59 = sbr.rel (0) target = $region69
    $region68: #{bert_model_1_forward.1} parent=1 // pred_region
      _
    $region69: #{bert_model_1_forward.1} parent=1 // pred_fallthru
      _
    // Predicated region
    $region70: #{bert_model_1_forward.1} parent=1 // pred_check
      _
    $region71: #{bert_model_1_forward.1} parent=1 // pred_check_branch
      %61 = sbr.rel (0) target = $region73
    $region72: #{bert_model_1_forward.1} parent=1 // pred_region
      _
    $region73: #{bert_model_1_forward.1} parent=1 // pred_fallthru
      _
    // Predicated region
    $region74: #{bert_model_1_forward.1} parent=1 // pred_check
      _
    $region75: #{bert_model_1_forward.1} parent=1 // pred_check_branch
      %63 = sbr.rel (0) target = $region77
    $region76: #{bert_model_1_forward.1} parent=1 // pred_region
      _
    $region77: #{bert_model_1_forward.1} parent=1 // pred_fallthru
      _
    // Predicated region
    $region78: #{bert_model_1_forward.1} parent=1 // pred_check
      _
    $region79: #{bert_model_1_forward.1} parent=1 // pred_check_branch
      %65 = sbr.rel (0) target = $region81
    $region80: #{bert_model_1_forward.1} parent=1 // pred_region
      _
    $region81: #{bert_model_1_forward.1} parent=1 // pred_fallthru
      _
    %v66 = vld [vmem:[%s0] sm:$0xff]
    %v67 = vld [vmem:[%s0 + $0x8] sm:$0xff]
    %v68 = vld [vmem:[%s2] sm:$0x1]
    %v69 = vld [vmem:[%s3] sm:$0x1]
    %vm70 = vcmask 261120
    %v71 = vsel %vm70, %v66, 0.0
    %72 = vadd.xlane.f32.xlu0 %v71
    %v73 = vpop.xlane.xlu0 %72
    %v74 = vsel %vm70, %v67, 0.0
    %75 = vadd.xlane.f32.xlu0 %v74
    %v76 = vpop.xlane.xlu0 %75
    %v77 = vrcp.pop 32.0
    %v78 = vmul.f32 32.0, %v77
    %v79 = vsub.f32 1.0, %v78
    %v80 = vmul.f32 %v77, %v79
    %v81 = vadd.f32 %v77, %v80
    %vm82 = vweird.f32 %v77
    %v83 = vsel %vm82, %v77, %v81
    %v84 = vmul.f32 %v73, %v83
    %v85 = vmul.f32 %v76, %v83
    %v86 = vsub.f32 %v66, %v84
    %v87 = vsub.f32 %v67, %v85
    %v88 = vmul.f32 %v86, %v86
    %v89 = vmul.f32 %v87, %v87
    %v90 = vsel %vm70, %v88, 0.0
    %91 = vadd.xlane.f32.xlu0 %v90
    %v92 = vpop.xlane.xlu0 %91
    %v93 = vsel %vm70, %v89, 0.0
    %94 = vadd.xlane.f32.xlu0 %v93
    %v95 = vpop.xlane.xlu0 %94
    %v96 = vmul.f32 %v92, %v83
    %v97 = vmul.f32 %v95, %v83
    %v98 = vadd.f32 %v96, 1e-12
    %v99 = vadd.f32 %v97, 1e-12
    %v100 = vrsqrt.pop %v98
    %v101 = vmul.f32 %v100, %v98
    %v102 = vmul.f32 %v101, %v100
    %v103 = vmul.f32 0.5, %v102
    %v104 = vsub.f32 1.5, %v103
    %v105 = vmul.f32 %v100, %v104
    %vm106 = vweird.f32 %v98
    %vm107 = vweird.f32 %v100
    %vm108 = vmor %vm106, %vm107
    %v109 = vsel %vm108, %v100, %v105
    %v110 = vrsqrt.pop %v99
    %v111 = vmul.f32 %v110, %v99
    %v112 = vmul.f32 %v111, %v110
    %v113 = vmul.f32 0.5, %v112
    %v114 = vsub.f32 1.5, %v113
    %v115 = vmul.f32 %v110, %v114
    %vm116 = vweird.f32 %v99
    %vm117 = vweird.f32 %v110
    %vm118 = vmor %vm116, %vm117
    %v119 = vsel %vm118, %v110, %v115
    %v120 = vmul.f32 %v86, %v109
    %v121 = vmul.f32 %v87, %v119
    %v123 = vperm.slane %v68, 0
    %v125 = vmul.f32 %v120, %v123
    %v126 = vmul.f32 %v121, %v123
    %v128 = vperm.slane %v69, 0
    %v130 = vadd.f32 %v125, %v128
    %v131 = vadd.f32 %v126, %v128
    %v132 = vld [vmem:[%s1] sm:$0xff]
    %v133 = vld [vmem:[%s1 + $0x8] sm:$0xff]
    %v134 = vld [vmem:[%s4] sm:$0xff]
    %v135 = vld [vmem:[%s4 + $0x8] sm:$0xff]
    %v136 = vld [vmem:[%s4 + $0x10] sm:$0xff]
    %v137 = vld [vmem:[%s4 + $0x18] sm:$0xff]
    %v138 = vld [vmem:[%s5] sm:$0x1]
    %v140 = vperm.slane %v138, 0
    %v143 = vsel %vm70, %v130, 0
    %v146 = vsel %vm70, %v131, 0
    %148 = vmatpush.msra.mxu0 0.0
    %149 = vmatpush.msra.mxu0 0.0
    %150 = vmatpush.msra.mxu0 0.0
    %151 = vmatpush.msra.mxu0 0.0
    %152 = vmatpush.msra.mxu0 0.0
    %153 = vmatpush.msra.mxu0 0.0
    %154 = vmatpush.msra.mxu0 0.0
    %155 = vmatpush.msra.mxu0 0.0
    %156 = vmatpush.msra.mxu0 0.0
    %157 = vmatpush.msra.mxu0 0.0
    %158 = vmatpush.msra.mxu0 0.0
    %159 = vmatpush.msra.mxu0 0.0
    %160 = vmatpush.msra.mxu0 %v137
    %161 = vmatpush.msra.mxu0 %v136
    %162 = vmatpush.msra.mxu0 %v135
    %163 = vmatpush.msra.mxu0 %v134
    %164 = vmatmul.f32.gmra.mxu0 %v143
    %v165 = vpop.f32.mrf.mxu0
    %v166 = vadd.f32 %v140, %v165
    %167 = vmatmul.f32.gmra.mxu0 %v146
    %v168 = vpop.f32.mrf.mxu0
    %v169 = vadd.f32 %v140, %v168
    %170 = vdwg.mxu0
    %172 = vrot.lane.b32.xlu0 %v166, 96
    %v173 = vpop.permute.xlu0 %172
    %vm174 = vcmask 64512
    %v175 = vsel %vm174, %v166, 0
    %v177 = vsel %vm174, %v173, 0
    %179 = vmatpush.xpose.msra.mxu0 0.0
    %180 = vmatpush.xpose.msra.mxu0 0.0
    %181 = vmatpush.xpose.msra.mxu0 0.0
    %182 = vmatpush.xpose.msra.mxu0 0.0
    %183 = vmatpush.xpose.msra.mxu0 0.0
    %184 = vmatpush.xpose.msra.mxu0 0.0
    %185 = vmatpush.xpose.msra.mxu0 0.0
    %186 = vmatpush.xpose.msra.mxu0 0.0
    %187 = vmatpush.xpose.msra.mxu0 0.0
    %188 = vmatpush.xpose.msra.mxu0 0.0
    %189 = vmatpush.xpose.msra.mxu0 0.0
    %190 = vmatpush.xpose.msra.mxu0 0.0
    %191 = vmatpush.xpose.msra.mxu0 0.0
    %192 = vmatpush.xpose.msra.mxu0 0.0
    %193 = vmatpush.xpose.msra.mxu0 0.0
    %194 = vmatpush.xpose.msra.mxu0 %v177
    %195 = vmatmul.f32.gmra.mxu0 %v175
    %v196 = vpop.f32.mrf.mxu0
    %v197 = vadd.f32 %v132, %v196
    %198 = vdwg.mxu0
    %v199 = vsel %vm174, %v197, -inf
    %200 = vmax.xlane.f32.xlu0 %v199
    %v201 = vpop.xlane.xlu0 %200
    %v202 = vsub.f32 %v197, %v201
    %v203 = vmul.f32 %v202, 1.442695
    %v204 = vpow.pop %v203
    %v205 = vsel %vm174, %v204, 0.0
    %206 = vadd.xlane.f32.xlu0 %v205
    %v207 = vpop.xlane.xlu0 %206
    %v208 = vrcp.pop %v207
    %v209 = vmul.f32 %v204, %v208
    %210 = vrot.lane.b32.xlu0 %v166, 64
    %v211 = vpop.permute.xlu0 %210
    %v214 = vsel %vm174, %v209, 0
    %216 = vmatpush.msra.mxu0 0.0
    %217 = vmatpush.msra.mxu0 0.0
    %218 = vmatpush.msra.mxu0 0.0
    %219 = vmatpush.msra.mxu0 0.0
    %220 = vmatpush.msra.mxu0 0.0
    %221 = vmatpush.msra.mxu0 0.0
    %222 = vmatpush.msra.mxu0 0.0
    %223 = vmatpush.msra.mxu0 0.0
    %224 = vmatpush.msra.mxu0 0.0
    %225 = vmatpush.msra.mxu0 0.0
    %226 = vmatpush.msra.mxu0 0.0
    %227 = vmatpush.msra.mxu0 0.0
    %228 = vmatpush.msra.mxu0 0.0
    %229 = vmatpush.msra.mxu0 0.0
    %230 = vmatpush.msra.mxu0 0.0
    %231 = vmatpush.msra.mxu0 %v211
    %232 = vmatmul.f32.gmra.mxu0 %v214
    %v233 = vpop.f32.mrf.mxu0
    %v234 = vadd.f32 0.0, %v233
    %235 = vdwg.mxu0
    %236 = vrot.lane.b32.xlu0 %v166, 120
    %v237 = vpop.permute.xlu0 %236
    %238 = vrot.lane.b32.xlu0 %v166, 88
    %v239 = vpop.permute.xlu0 %238
    %v240 = vsel %vm174, %v237, 0
    %v242 = vsel %vm174, %v239, 0
    %244 = vmatpush.xpose.msra.mxu0 0.0
    %245 = vmatpush.xpose.msra.mxu0 0.0
    %246 = vmatpush.xpose.msra.mxu0 0.0
    %247 = vmatpush.xpose.msra.mxu0 0.0
    %248 = vmatpush.xpose.msra.mxu0 0.0
    %249 = vmatpush.xpose.msra.mxu0 0.0
    %250 = vmatpush.xpose.msra.mxu0 0.0
    %251 = vmatpush.xpose.msra.mxu0 0.0
    %252 = vmatpush.xpose.msra.mxu0 0.0
    %253 = vmatpush.xpose.msra.mxu0 0.0
    %254 = vmatpush.xpose.msra.mxu0 0.0
    %255 = vmatpush.xpose.msra.mxu0 0.0
    %256 = vmatpush.xpose.msra.mxu0 0.0
    %257 = vmatpush.xpose.msra.mxu0 0.0
    %258 = vmatpush.xpose.msra.mxu0 0.0
    %259 = vmatpush.xpose.msra.mxu0 %v242
    %260 = vmatmul.f32.gmra.mxu0 %v240
    %v261 = vpop.f32.mrf.mxu0
    %v262 = vadd.f32 %v132, %v261
    %263 = vdwg.mxu0
    %v264 = vsel %vm174, %v262, -inf
    %265 = vmax.xlane.f32.xlu0 %v264
    %v266 = vpop.xlane.xlu0 %265
    %v267 = vsub.f32 %v262, %v266
    %v268 = vmul.f32 %v267, 1.442695
    %v269 = vpow.pop %v268
    %v270 = vsel %vm174, %v269, 0.0
    %271 = vadd.xlane.f32.xlu0 %v270
    %v272 = vpop.xlane.xlu0 %271
    %v273 = vrcp.pop %v272
    %v274 = vmul.f32 %v269, %v273
    %275 = vrot.lane.b32.xlu0 %v166, 56
    %v276 = vpop.permute.xlu0 %275
    %v279 = vsel %vm174, %v274, 0
    %281 = vmatpush.msra.mxu0 0.0
    %282 = vmatpush.msra.mxu0 0.0
    %283 = vmatpush.msra.mxu0 0.0
    %284 = vmatpush.msra.mxu0 0.0
    %285 = vmatpush.msra.mxu0 0.0
    %286 = vmatpush.msra.mxu0 0.0
    %287 = vmatpush.msra.mxu0 0.0
    %288 = vmatpush.msra.mxu0 0.0
    %289 = vmatpush.msra.mxu0 0.0
    %290 = vmatpush.msra.mxu0 0.0
    %291 = vmatpush.msra.mxu0 0.0
    %292 = vmatpush.msra.mxu0 0.0
    %293 = vmatpush.msra.mxu0 0.0
    %294 = vmatpush.msra.mxu0 0.0
    %295 = vmatpush.msra.mxu0 0.0
    %296 = vmatpush.msra.mxu0 %v276
    %297 = vmatmul.f32.gmra.mxu0 %v279
    %v298 = vpop.f32.mrf.mxu0
    %v299 = vadd.f32 0.0, %v298
    %300 = vdwg.mxu0
    %301 = vrot.lane.b32.xlu0 %v166, 112
    %v302 = vpop.permute.xlu0 %301
    %303 = vrot.lane.b32.xlu0 %v166, 80
    %v304 = vpop.permute.xlu0 %303
    %v305 = vsel %vm174, %v302, 0
    %v307 = vsel %vm174, %v304, 0
    %309 = vmatpush.xpose.msra.mxu0 0.0
    %310 = vmatpush.xpose.msra.mxu0 0.0
    %311 = vmatpush.xpose.msra.mxu0 0.0
    %312 = vmatpush.xpose.msra.mxu0 0.0
    %313 = vmatpush.xpose.msra.mxu0 0.0
    %314 = vmatpush.xpose.msra.mxu0 0.0
    %315 = vmatpush.xpose.msra.mxu0 0.0
    %316 = vmatpush.xpose.msra.mxu0 0.0
    %317 = vmatpush.xpose.msra.mxu0 0.0
    %318 = vmatpush.xpose.msra.mxu0 0.0
    %319 = vmatpush.xpose.msra.mxu0 0.0
    %320 = vmatpush.xpose.msra.mxu0 0.0
    %321 = vmatpush.xpose.msra.mxu0 0.0
    %322 = vmatpush.xpose.msra.mxu0 0.0
    %323 = vmatpush.xpose.msra.mxu0 0.0
    %324 = vmatpush.xpose.msra.mxu0 %v307
    %325 = vmatmul.f32.gmra.mxu0 %v305
    %v326 = vpop.f32.mrf.mxu0
    %v327 = vadd.f32 %v132, %v326
    %328 = vdwg.mxu0
    %v329 = vsel %vm174, %v327, -inf
    %330 = vmax.xlane.f32.xlu0 %v329
    %v331 = vpop.xlane.xlu0 %330
    %v332 = vsub.f32 %v327, %v331
    %v333 = vmul.f32 %v332, 1.442695
    %v334 = vpow.pop %v333
    %v335 = vsel %vm174, %v334, 0.0
    %336 = vadd.xlane.f32.xlu0 %v335
    %v337 = vpop.xlane.xlu0 %336
    %v338 = vrcp.pop %v337
    %v339 = vmul.f32 %v334, %v338
    %340 = vrot.lane.b32.xlu0 %v166, 48
    %v341 = vpop.permute.xlu0 %340
    %v344 = vsel %vm174, %v339, 0
    %346 = vmatpush.msra.mxu0 0.0
    %347 = vmatpush.msra.mxu0 0.0
    %348 = vmatpush.msra.mxu0 0.0
    %349 = vmatpush.msra.mxu0 0.0
    %350 = vmatpush.msra.mxu0 0.0
    %351 = vmatpush.msra.mxu0 0.0
    %352 = vmatpush.msra.mxu0 0.0
    %353 = vmatpush.msra.mxu0 0.0
    %354 = vmatpush.msra.mxu0 0.0
    %355 = vmatpush.msra.mxu0 0.0
    %356 = vmatpush.msra.mxu0 0.0
    %357 = vmatpush.msra.mxu0 0.0
    %358 = vmatpush.msra.mxu0 0.0
    %359 = vmatpush.msra.mxu0 0.0
    %360 = vmatpush.msra.mxu0 0.0
    %361 = vmatpush.msra.mxu0 %v341
    %362 = vmatmul.f32.gmra.mxu0 %v344
    %v363 = vpop.f32.mrf.mxu0
    %v364 = vadd.f32 0.0, %v363
    %365 = vdwg.mxu0
    %366 = vrot.lane.b32.xlu0 %v166, 104
    %v367 = vpop.permute.xlu0 %366
    %368 = vrot.lane.b32.xlu0 %v166, 72
    %v369 = vpop.permute.xlu0 %368
    %v370 = vsel %vm174, %v367, 0
    %v372 = vsel %vm174, %v369, 0
    %374 = vmatpush.xpose.msra.mxu0 0.0
    %375 = vmatpush.xpose.msra.mxu0 0.0
    %376 = vmatpush.xpose.msra.mxu0 0.0
    %377 = vmatpush.xpose.msra.mxu0 0.0
    %378 = vmatpush.xpose.msra.mxu0 0.0
    %379 = vmatpush.xpose.msra.mxu0 0.0
    %380 = vmatpush.xpose.msra.mxu0 0.0
    %381 = vmatpush.xpose.msra.mxu0 0.0
    %382 = vmatpush.xpose.msra.mxu0 0.0
    %383 = vmatpush.xpose.msra.mxu0 0.0
    %384 = vmatpush.xpose.msra.mxu0 0.0
    %385 = vmatpush.xpose.msra.mxu0 0.0
    %386 = vmatpush.xpose.msra.mxu0 0.0
    %387 = vmatpush.xpose.msra.mxu0 0.0
    %388 = vmatpush.xpose.msra.mxu0 0.0
    %389 = vmatpush.xpose.msra.mxu0 %v372
    %390 = vmatmul.f32.gmra.mxu0 %v370
    %v391 = vpop.f32.mrf.mxu0
    %v392 = vadd.f32 %v132, %v391
    %393 = vdwg.mxu0
    %v394 = vsel %vm174, %v392, -inf
    %395 = vmax.xlane.f32.xlu0 %v394
    %v396 = vpop.xlane.xlu0 %395
    %v397 = vsub.f32 %v392, %v396
    %v398 = vmul.f32 %v397, 1.442695
    %v399 = vpow.pop %v398
    %v400 = vsel %vm174, %v399, 0.0
    %401 = vadd.xlane.f32.xlu0 %v400
    %v402 = vpop.xlane.xlu0 %401
    %v403 = vrcp.pop %v402
    %v404 = vmul.f32 %v399, %v403
    %405 = vrot.lane.b32.xlu0 %v166, 40
    %v406 = vpop.permute.xlu0 %405
    %v409 = vsel %vm174, %v404, 0
    %411 = vmatpush.msra.mxu0 0.0
    %412 = vmatpush.msra.mxu0 0.0
    %413 = vmatpush.msra.mxu0 0.0
    %414 = vmatpush.msra.mxu0 0.0
    %415 = vmatpush.msra.mxu0 0.0
    %416 = vmatpush.msra.mxu0 0.0
    %417 = vmatpush.msra.mxu0 0.0
    %418 = vmatpush.msra.mxu0 0.0
    %419 = vmatpush.msra.mxu0 0.0
    %420 = vmatpush.msra.mxu0 0.0
    %421 = vmatpush.msra.mxu0 0.0
    %422 = vmatpush.msra.mxu0 0.0
    %423 = vmatpush.msra.mxu0 0.0
    %424 = vmatpush.msra.mxu0 0.0
    %425 = vmatpush.msra.mxu0 0.0
    %426 = vmatpush.msra.mxu0 %v406
    %427 = vmatmul.f32.gmra.mxu0 %v409
    %v428 = vpop.f32.mrf.mxu0
    %v429 = vadd.f32 0.0, %v428
    %430 = vdwg.mxu0
    %432 = vrot.lane.b32.xlu0 %v299, 8
    %v433 = vpop.permute.xlu0 %432
    %436 = vrot.lane.b32.xlu0 %v364, 16
    %v437 = vpop.permute.xlu0 %436
    %440 = vrot.lane.b32.xlu0 %v429, 24
    %v441 = vpop.permute.xlu0 %440
    %v443 = vsel %vm174, %v234, %v433
    %vm444 = vcmask 130048
    %v445 = vsel %vm444, %v443, %v437
    %vm446 = vcmask 195584
    %v447 = vsel %vm446, %v445, %v441
    %449 = vrot.lane.b32.xlu0 %v169, 96
    %v450 = vpop.permute.xlu0 %449
    %v451 = vsel %vm174, %v169, 0
    %v453 = vsel %vm174, %v450, 0
    %455 = vmatpush.xpose.msra.mxu0 0.0
    %456 = vmatpush.xpose.msra.mxu0 0.0
    %457 = vmatpush.xpose.msra.mxu0 0.0
    %458 = vmatpush.xpose.msra.mxu0 0.0
    %459 = vmatpush.xpose.msra.mxu0 0.0
    %460 = vmatpush.xpose.msra.mxu0 0.0
    %461 = vmatpush.xpose.msra.mxu0 0.0
    %462 = vmatpush.xpose.msra.mxu0 0.0
    %463 = vmatpush.xpose.msra.mxu0 0.0
    %464 = vmatpush.xpose.msra.mxu0 0.0
    %465 = vmatpush.xpose.msra.mxu0 0.0
    %466 = vmatpush.xpose.msra.mxu0 0.0
    %467 = vmatpush.xpose.msra.mxu0 0.0
    %468 = vmatpush.xpose.msra.mxu0 0.0
    %469 = vmatpush.xpose.msra.mxu0 0.0
    %470 = vmatpush.xpose.msra.mxu0 %v453
    %471 = vmatmul.f32.gmra.mxu0 %v451
    %v472 = vpop.f32.mrf.mxu0
    %v473 = vadd.f32 %v133, %v472
    %474 = vdwg.mxu0
    %v475 = vsel %vm174, %v473, -inf
    %476 = vmax.xlane.f32.xlu0 %v475
    %v477 = vpop.xlane.xlu0 %476
    %v478 = vsub.f32 %v473, %v477
    %v479 = vmul.f32 %v478, 1.442695
    %v480 = vpow.pop %v479
    %v481 = vsel %vm174, %v480, 0.0
    %482 = vadd.xlane.f32.xlu0 %v481
    %v483 = vpop.xlane.xlu0 %482
    %v484 = vrcp.pop %v483
    %v485 = vmul.f32 %v480, %v484
    %486 = vrot.lane.b32.xlu0 %v169, 64
    %v487 = vpop.permute.xlu0 %486
    %v490 = vsel %vm174, %v485, 0
    %492 = vmatpush.msra.mxu0 0.0
    %493 = vmatpush.msra.mxu0 0.0
    %494 = vmatpush.msra.mxu0 0.0
    %495 = vmatpush.msra.mxu0 0.0
    %496 = vmatpush.msra.mxu0 0.0
    %497 = vmatpush.msra.mxu0 0.0
    %498 = vmatpush.msra.mxu0 0.0
    %499 = vmatpush.msra.mxu0 0.0
    %500 = vmatpush.msra.mxu0 0.0
    %501 = vmatpush.msra.mxu0 0.0
    %502 = vmatpush.msra.mxu0 0.0
    %503 = vmatpush.msra.mxu0 0.0
    %504 = vmatpush.msra.mxu0 0.0
    %505 = vmatpush.msra.mxu0 0.0
    %506 = vmatpush.msra.mxu0 0.0
    %507 = vmatpush.msra.mxu0 %v487
    %508 = vmatmul.f32.gmra.mxu0 %v490
    %v509 = vpop.f32.mrf.mxu0
    %v510 = vadd.f32 0.0, %v509
    %511 = vdwg.mxu0
    %512 = vrot.lane.b32.xlu0 %v169, 120
    %v513 = vpop.permute.xlu0 %512
    %514 = vrot.lane.b32.xlu0 %v169, 88
    %v515 = vpop.permute.xlu0 %514
    %v516 = vsel %vm174, %v513, 0
    %v518 = vsel %vm174, %v515, 0
    %520 = vmatpush.xpose.msra.mxu0 0.0
    %521 = vmatpush.xpose.msra.mxu0 0.0
    %522 = vmatpush.xpose.msra.mxu0 0.0
    %523 = vmatpush.xpose.msra.mxu0 0.0
    %524 = vmatpush.xpose.msra.mxu0 0.0
    %525 = vmatpush.xpose.msra.mxu0 0.0
    %526 = vmatpush.xpose.msra.mxu0 0.0
    %527 = vmatpush.xpose.msra.mxu0 0.0
    %528 = vmatpush.xpose.msra.mxu0 0.0
    %529 = vmatpush.xpose.msra.mxu0 0.0
    %530 = vmatpush.xpose.msra.mxu0 0.0
    %531 = vmatpush.xpose.msra.mxu0 0.0
    %532 = vmatpush.xpose.msra.mxu0 0.0
    %533 = vmatpush.xpose.msra.mxu0 0.0
    %534 = vmatpush.xpose.msra.mxu0 0.0
    %535 = vmatpush.xpose.msra.mxu0 %v518
    %536 = vmatmul.f32.gmra.mxu0 %v516
    %v537 = vpop.f32.mrf.mxu0
    %v538 = vadd.f32 %v133, %v537
    %539 = vdwg.mxu0
    %v540 = vsel %vm174, %v538, -inf
    %541 = vmax.xlane.f32.xlu0 %v540
    %v542 = vpop.xlane.xlu0 %541
    %v543 = vsub.f32 %v538, %v542
    %v544 = vmul.f32 %v543, 1.442695
    %v545 = vpow.pop %v544
    %v546 = vsel %vm174, %v545, 0.0
    %547 = vadd.xlane.f32.xlu0 %v546
    %v548 = vpop.xlane.xlu0 %547
    %v549 = vrcp.pop %v548
    %v550 = vmul.f32 %v545, %v549
    %551 = vrot.lane.b32.xlu0 %v169, 56
    %v552 = vpop.permute.xlu0 %551
    %v555 = vsel %vm174, %v550, 0
    %557 = vmatpush.msra.mxu0 0.0
    %558 = vmatpush.msra.mxu0 0.0
    %559 = vmatpush.msra.mxu0 0.0
    %560 = vmatpush.msra.mxu0 0.0
    %561 = vmatpush.msra.mxu0 0.0
    %562 = vmatpush.msra.mxu0 0.0
    %563 = vmatpush.msra.mxu0 0.0
    %564 = vmatpush.msra.mxu0 0.0
    %565 = vmatpush.msra.mxu0 0.0
    %566 = vmatpush.msra.mxu0 0.0
    %567 = vmatpush.msra.mxu0 0.0
    %568 = vmatpush.msra.mxu0 0.0
    %569 = vmatpush.msra.mxu0 0.0
    %570 = vmatpush.msra.mxu0 0.0
    %571 = vmatpush.msra.mxu0 0.0
    %572 = vmatpush.msra.mxu0 %v552
    %573 = vmatmul.f32.gmra.mxu0 %v555
    %v574 = vpop.f32.mrf.mxu0
    %v575 = vadd.f32 0.0, %v574
    %576 = vdwg.mxu0
    %577 = vrot.lane.b32.xlu0 %v169, 112
    %v578 = vpop.permute.xlu0 %577
    %579 = vrot.lane.b32.xlu0 %v169, 80
    %v580 = vpop.permute.xlu0 %579
    %v581 = vsel %vm174, %v578, 0
    %v583 = vsel %vm174, %v580, 0
    %585 = vmatpush.xpose.msra.mxu0 0.0
    %586 = vmatpush.xpose.msra.mxu0 0.0
    %587 = vmatpush.xpose.msra.mxu0 0.0
    %588 = vmatpush.xpose.msra.mxu0 0.0
    %589 = vmatpush.xpose.msra.mxu0 0.0
    %590 = vmatpush.xpose.msra.mxu0 0.0
    %591 = vmatpush.xpose.msra.mxu0 0.0
    %592 = vmatpush.xpose.msra.mxu0 0.0
    %593 = vmatpush.xpose.msra.mxu0 0.0
    %594 = vmatpush.xpose.msra.mxu0 0.0
    %595 = vmatpush.xpose.msra.mxu0 0.0
    %596 = vmatpush.xpose.msra.mxu0 0.0
    %597 = vmatpush.xpose.msra.mxu0 0.0
    %598 = vmatpush.xpose.msra.mxu0 0.0
    %599 = vmatpush.xpose.msra.mxu0 0.0
    %600 = vmatpush.xpose.msra.mxu0 %v583
    %601 = vmatmul.f32.gmra.mxu0 %v581
    %v602 = vpop.f32.mrf.mxu0
    %v603 = vadd.f32 %v133, %v602
    %604 = vdwg.mxu0
    %v605 = vsel %vm174, %v603, -inf
    %606 = vmax.xlane.f32.xlu0 %v605
    %v607 = vpop.xlane.xlu0 %606
    %v608 = vsub.f32 %v603, %v607
    %v609 = vmul.f32 %v608, 1.442695
    %v610 = vpow.pop %v609
    %v611 = vsel %vm174, %v610, 0.0
    %612 = vadd.xlane.f32.xlu0 %v611
    %v613 = vpop.xlane.xlu0 %612
    %v614 = vrcp.pop %v613
    %v615 = vmul.f32 %v610, %v614
    %616 = vrot.lane.b32.xlu0 %v169, 48
    %v617 = vpop.permute.xlu0 %616
    %v620 = vsel %vm174, %v615, 0
    %622 = vmatpush.msra.mxu0 0.0
    %623 = vmatpush.msra.mxu0 0.0
    %624 = vmatpush.msra.mxu0 0.0
    %625 = vmatpush.msra.mxu0 0.0
    %626 = vmatpush.msra.mxu0 0.0
    %627 = vmatpush.msra.mxu0 0.0
    %628 = vmatpush.msra.mxu0 0.0
    %629 = vmatpush.msra.mxu0 0.0
    %630 = vmatpush.msra.mxu0 0.0
    %631 = vmatpush.msra.mxu0 0.0
    %632 = vmatpush.msra.mxu0 0.0
    %633 = vmatpush.msra.mxu0 0.0
    %634 = vmatpush.msra.mxu0 0.0
    %635 = vmatpush.msra.mxu0 0.0
    %636 = vmatpush.msra.mxu0 0.0
    %637 = vmatpush.msra.mxu0 %v617
    %638 = vmatmul.f32.gmra.mxu0 %v620
    %v639 = vpop.f32.mrf.mxu0
    %v640 = vadd.f32 0.0, %v639
    %641 = vdwg.mxu0
    %642 = vrot.lane.b32.xlu0 %v169, 104
    %v643 = vpop.permute.xlu0 %642
    %644 = vrot.lane.b32.xlu0 %v169, 72
    %v645 = vpop.permute.xlu0 %644
    %v646 = vsel %vm174, %v643, 0
    %v648 = vsel %vm174, %v645, 0
    %650 = vmatpush.xpose.msra.mxu0 0.0
    %651 = vmatpush.xpose.msra.mxu0 0.0
    %652 = vmatpush.xpose.msra.mxu0 0.0
    %653 = vmatpush.xpose.msra.mxu0 0.0
    %654 = vmatpush.xpose.msra.mxu0 0.0
    %655 = vmatpush.xpose.msra.mxu0 0.0
    %656 = vmatpush.xpose.msra.mxu0 0.0
    %657 = vmatpush.xpose.msra.mxu0 0.0
    %658 = vmatpush.xpose.msra.mxu0 0.0
    %659 = vmatpush.xpose.msra.mxu0 0.0
    %660 = vmatpush.xpose.msra.mxu0 0.0
    %661 = vmatpush.xpose.msra.mxu0 0.0
    %662 = vmatpush.xpose.msra.mxu0 0.0
    %663 = vmatpush.xpose.msra.mxu0 0.0
    %664 = vmatpush.xpose.msra.mxu0 0.0
    %665 = vmatpush.xpose.msra.mxu0 %v648
    %666 = vmatmul.f32.gmra.mxu0 %v646
    %v667 = vpop.f32.mrf.mxu0
    %v668 = vadd.f32 %v133, %v667
    %669 = vdwg.mxu0
    %v670 = vsel %vm174, %v668, -inf
    %671 = vmax.xlane.f32.xlu0 %v670
    %v672 = vpop.xlane.xlu0 %671
    %v673 = vsub.f32 %v668, %v672
    %v674 = vmul.f32 %v673, 1.442695
    %v675 = vpow.pop %v674
    %v676 = vsel %vm174, %v675, 0.0
    %677 = vadd.xlane.f32.xlu0 %v676
    %v678 = vpop.xlane.xlu0 %677
    %v679 = vrcp.pop %v678
    %v680 = vmul.f32 %v675, %v679
    %681 = vrot.lane.b32.xlu0 %v169, 40
    %v682 = vpop.permute.xlu0 %681
    %v685 = vsel %vm174, %v680, 0
    %687 = vmatpush.msra.mxu0 0.0
    %688 = vmatpush.msra.mxu0 0.0
    %689 = vmatpush.msra.mxu0 0.0
    %690 = vmatpush.msra.mxu0 0.0
    %691 = vmatpush.msra.mxu0 0.0
    %692 = vmatpush.msra.mxu0 0.0
    %693 = vmatpush.msra.mxu0 0.0
    %694 = vmatpush.msra.mxu0 0.0
    %695 = vmatpush.msra.mxu0 0.0
    %696 = vmatpush.msra.mxu0 0.0
    %697 = vmatpush.msra.mxu0 0.0
    %698 = vmatpush.msra.mxu0 0.0
    %699 = vmatpush.msra.mxu0 0.0
    %700 = vmatpush.msra.mxu0 0.0
    %701 = vmatpush.msra.mxu0 0.0
    %702 = vmatpush.msra.mxu0 %v682
    %703 = vmatmul.f32.gmra.mxu0 %v685
    %v704 = vpop.f32.mrf.mxu0
    %v705 = vadd.f32 0.0, %v704
    %706 = vdwg.mxu0
    %708 = vrot.lane.b32.xlu0 %v575, 8
    %v709 = vpop.permute.xlu0 %708
    %712 = vrot.lane.b32.xlu0 %v640, 16
    %v713 = vpop.permute.xlu0 %712
    %716 = vrot.lane.b32.xlu0 %v705, 24
    %v717 = vpop.permute.xlu0 %716
    %v719 = vsel %vm174, %v510, %v709
    %v720 = vsel %vm444, %v719, %v713
    %v721 = vsel %vm446, %v720, %v717
    %v722 = vld [vmem:[%s6] sm:$0xff]
    %v723 = vld [vmem:[%s6 + $0x8] sm:$0xff]
    %v724 = vld [vmem:[%s6 + $0x10] sm:$0xff]
    %v725 = vld [vmem:[%s6 + $0x18] sm:$0xff]
    %v726 = vld [vmem:[%s7] sm:$0x1]
    %v728 = vperm.slane %v726, 0
    %v731 = vsel %vm70, %v447, 0
    %v734 = vsel %vm70, %v721, 0
    %736 = vmatpush.msra.mxu0 0.0
    %737 = vmatpush.msra.mxu0 0.0
    %738 = vmatpush.msra.mxu0 0.0
    %739 = vmatpush.msra.mxu0 0.0
    %740 = vmatpush.msra.mxu0 0.0
    %741 = vmatpush.msra.mxu0 0.0
    %742 = vmatpush.msra.mxu0 0.0
    %743 = vmatpush.msra.mxu0 0.0
    %744 = vmatpush.msra.mxu0 0.0
    %745 = vmatpush.msra.mxu0 0.0
    %746 = vmatpush.msra.mxu0 0.0
    %747 = vmatpush.msra.mxu0 0.0
    %748 = vmatpush.msra.mxu0 %v725
    %749 = vmatpush.msra.mxu0 %v724
    %750 = vmatpush.msra.mxu0 %v723
    %751 = vmatpush.msra.mxu0 %v722
    %752 = vmatmul.f32.gmra.mxu0 %v731
    %v753 = vpop.f32.mrf.mxu0
    %v754 = vadd.f32 %v728, %v753
    %755 = vmatmul.f32.gmra.mxu0 %v734
    %v756 = vpop.f32.mrf.mxu0
    %v757 = vadd.f32 %v728, %v756
    %758 = vdwg.mxu0
    %v759 = vadd.f32 %v754, %v130
    %v760 = vadd.f32 %v757, %v131
    %v761 = vld [vmem:[%s8] sm:$0x1]
    %v762 = vld [vmem:[%s9] sm:$0x1]
    %v763 = vsel %vm70, %v759, 0.0
    %764 = vadd.xlane.f32.xlu0 %v763
    %v765 = vpop.xlane.xlu0 %764
    %v766 = vsel %vm70, %v760, 0.0
    %767 = vadd.xlane.f32.xlu0 %v766
    %v768 = vpop.xlane.xlu0 %767
    %v769 = vmul.f32 %v765, %v83
    %v770 = vmul.f32 %v768, %v83
    %v771 = vsub.f32 %v759, %v769
    %v772 = vsub.f32 %v760, %v770
    %v773 = vmul.f32 %v771, %v771
    %v774 = vmul.f32 %v772, %v772
    %v775 = vsel %vm70, %v773, 0.0
    %776 = vadd.xlane.f32.xlu0 %v775
    %v777 = vpop.xlane.xlu0 %776
    %v778 = vsel %vm70, %v774, 0.0
    %779 = vadd.xlane.f32.xlu0 %v778
    %v780 = vpop.xlane.xlu0 %779
    %v781 = vmul.f32 %v777, %v83
    %v782 = vmul.f32 %v780, %v83
    %v783 = vadd.f32 %v781, 1e-12
    %v784 = vadd.f32 %v782, 1e-12
    %v785 = vrsqrt.pop %v783
    %v786 = vmul.f32 %v785, %v783
    %v787 = vmul.f32 %v786, %v785
    %v788 = vmul.f32 0.5, %v787
    %v789 = vsub.f32 1.5, %v788
    %v790 = vmul.f32 %v785, %v789
    %vm791 = vweird.f32 %v783
    %vm792 = vweird.f32 %v785
    %vm793 = vmor %vm791, %vm792
    %v794 = vsel %vm793, %v785, %v790
    %v795 = vrsqrt.pop %v784
    %v796 = vmul.f32 %v795, %v784
    %v797 = vmul.f32 %v796, %v795
    %v798 = vmul.f32 0.5, %v797
    %v799 = vsub.f32 1.5, %v798
    %v800 = vmul.f32 %v795, %v799
    %vm801 = vweird.f32 %v784
    %vm802 = vweird.f32 %v795
    %vm803 = vmor %vm801, %vm802
    %v804 = vsel %vm803, %v795, %v800
    %v805 = vmul.f32 %v771, %v794
    %v806 = vmul.f32 %v772, %v804
    %v808 = vperm.slane %v761, 0
    %v810 = vmul.f32 %v805, %v808
    %v811 = vmul.f32 %v806, %v808
    %v813 = vperm.slane %v762, 0
    %v815 = vadd.f32 %v810, %v813
    %v816 = vadd.f32 %v811, %v813
    %v817 = vld [vmem:[%s10] sm:$0xff]
    %v818 = vld [vmem:[%s10 + $0x8] sm:$0xff]
    %v819 = vld [vmem:[%s10 + $0x10] sm:$0xff]
    %v820 = vld [vmem:[%s10 + $0x18] sm:$0xff]
    %v821 = vld [vmem:[%s11] sm:$0x1]
    %v823 = vperm.slane %v821, 0
    %v826 = vsel %vm70, %v815, 0
    %v829 = vsel %vm70, %v816, 0
    %831 = vmatpush.msra.mxu0 0.0
    %832 = vmatpush.msra.mxu0 0.0
    %833 = vmatpush.msra.mxu0 0.0
    %834 = vmatpush.msra.mxu0 0.0
    %835 = vmatpush.msra.mxu0 0.0
    %836 = vmatpush.msra.mxu0 0.0
    %837 = vmatpush.msra.mxu0 0.0
    %838 = vmatpush.msra.mxu0 0.0
    %839 = vmatpush.msra.mxu0 0.0
    %840 = vmatpush.msra.mxu0 0.0
    %841 = vmatpush.msra.mxu0 0.0
    %842 = vmatpush.msra.mxu0 0.0
    %843 = vmatpush.msra.mxu0 %v820
    %844 = vmatpush.msra.mxu0 %v819
    %845 = vmatpush.msra.mxu0 %v818
    %846 = vmatpush.msra.mxu0 %v817
    %847 = vmatmul.f32.gmra.mxu0 %v826
    %v848 = vpop.f32.mrf.mxu0
    %v849 = vadd.f32 %v823, %v848
    %850 = vmatmul.f32.gmra.mxu0 %v829
    %v851 = vpop.f32.mrf.mxu0
    %v852 = vadd.f32 %v823, %v851
    %853 = vdwg.mxu0
    %v854 = vmul.f32 %v849, %v849
    %v855 = vmul.f32 %v852, %v852
    %v856 = vmul.f32 %v849, %v854
    %v857 = vmul.f32 %v852, %v855
    %v858 = vmul.f32 %v856, 0.044715
    %v859 = vmul.f32 %v857, 0.044715
    %v860 = vadd.f32 %v849, %v858
    %v861 = vadd.f32 %v852, %v859
    %v862 = vmul.f32 %v860, 0.7978846
    %v863 = vmul.f32 %v861, 0.7978846
    %v864 = vtanh.pop %v862
    %v865 = vtanh.pop %v863
    %v866 = vadd.f32 %v864, 1.0
    %v867 = vadd.f32 %v865, 1.0
    %v868 = vmul.f32 %v866, 0.5
    %v869 = vmul.f32 %v867, 0.5
    %v870 = vmul.f32 %v849, %v868
    %v871 = vmul.f32 %v852, %v869
    %v872 = vld [vmem:[%s12] sm:$0xff]
    %v873 = vld [vmem:[%s12 + $0x8] sm:$0xff]
    %v874 = vld [vmem:[%s12 + $0x10] sm:$0xff]
    %v875 = vld [vmem:[%s12 + $0x18] sm:$0xff]
    %v876 = vld [vmem:[%s12 + $0x20] sm:$0xff]
    %v877 = vld [vmem:[%s12 + $0x28] sm:$0xff]
    %v878 = vld [vmem:[%s12 + $0x30] sm:$0xff]
    %v879 = vld [vmem:[%s12 + $0x38] sm:$0xff]
    %v880 = vld [vmem:[%s13] sm:$0x1]
    %v882 = vperm.slane %v880, 0
    %vm884 = vcmask 523264
    %v886 = vsel %vm884, %v870, 0
    %v889 = vsel %vm884, %v871, 0
    %891 = vmatpush.msra.mxu0 0.0
    %892 = vmatpush.msra.mxu0 0.0
    %893 = vmatpush.msra.mxu0 0.0
    %894 = vmatpush.msra.mxu0 0.0
    %895 = vmatpush.msra.mxu0 0.0
    %896 = vmatpush.msra.mxu0 0.0
    %897 = vmatpush.msra.mxu0 0.0
    %898 = vmatpush.msra.mxu0 0.0
    %899 = vmatpush.msra.mxu0 %v879
    %900 = vmatpush.msra.mxu0 %v878
    %901 = vmatpush.msra.mxu0 %v877
    %902 = vmatpush.msra.mxu0 %v876
    %903 = vmatpush.msra.mxu0 %v875
    %904 = vmatpush.msra.mxu0 %v874
    %905 = vmatpush.msra.mxu0 %v873
    %906 = vmatpush.msra.mxu0 %v872
    %907 = vmatmul.f32.gmra.mxu0 %v886
    %v908 = vpop.f32.mrf.mxu0
    %v909 = vadd.f32 %v882, %v908
    %910 = vmatmul.f32.gmra.mxu0 %v889
    %v911 = vpop.f32.mrf.mxu0
    %v912 = vadd.f32 %v882, %v911
    %913 = vdwg.mxu0
    %v914 = vadd.f32 %v909, %v815
    %v915 = vadd.f32 %v912, %v816
    %v916 = vld [vmem:[%s14] sm:$0x1]
    %v917 = vld [vmem:[%s15] sm:$0x1]
    %v918 = vsel %vm70, %v914, 0.0
    %919 = vadd.xlane.f32.xlu0 %v918
    %v920 = vpop.xlane.xlu0 %919
    %v921 = vsel %vm70, %v915, 0.0
    %922 = vadd.xlane.f32.xlu0 %v921
    %v923 = vpop.xlane.xlu0 %922
    %v924 = vmul.f32 %v920, %v83
    %v925 = vmul.f32 %v923, %v83
    %v926 = vsub.f32 %v914, %v924
    %v927 = vsub.f32 %v915, %v925
    %v928 = vmul.f32 %v926, %v926
    %v929 = vmul.f32 %v927, %v927
    %v930 = vsel %vm70, %v928, 0.0
    %931 = vadd.xlane.f32.xlu0 %v930
    %v932 = vpop.xlane.xlu0 %931
    %v933 = vsel %vm70, %v929, 0.0
    %934 = vadd.xlane.f32.xlu0 %v933
    %v935 = vpop.xlane.xlu0 %934
    %v936 = vmul.f32 %v932, %v83
    %v937 = vmul.f32 %v935, %v83
    %v938 = vadd.f32 %v936, 1e-12
    %v939 = vadd.f32 %v937, 1e-12
    %v940 = vrsqrt.pop %v938
    %v941 = vmul.f32 %v940, %v938
    %v942 = vmul.f32 %v941, %v940
    %v943 = vmul.f32 0.5, %v942
    %v944 = vsub.f32 1.5, %v943
    %v945 = vmul.f32 %v940, %v944
    %vm946 = vweird.f32 %v938
    %vm947 = vweird.f32 %v940
    %vm948 = vmor %vm946, %vm947
    %v949 = vsel %vm948, %v940, %v945
    %v950 = vrsqrt.pop %v939
    %v951 = vmul.f32 %v950, %v939
    %v952 = vmul.f32 %v951, %v950
    %v953 = vmul.f32 0.5, %v952
    %v954 = vsub.f32 1.5, %v953
    %v955 = vmul.f32 %v950, %v954
    %vm956 = vweird.f32 %v939
    %vm957 = vweird.f32 %v950
    %vm958 = vmor %vm956, %vm957
    %v959 = vsel %vm958, %v950, %v955
    %v960 = vmul.f32 %v926, %v949
    %v961 = vmul.f32 %v927, %v959
    %v963 = vperm.slane %v916, 0
    %v965 = vmul.f32 %v960, %v963
    %v966 = vmul.f32 %v961, %v963
    %v968 = vperm.slane %v917, 0
    %v970 = vadd.f32 %v965, %v968
    %v971 = vadd.f32 %v966, %v968
    %s972 = scalar_lea.vmem %s4, 32
    %v973 = vld [vmem:[%s972] sm:$0xff]
    %v974 = vld [vmem:[%s972 + $0x8] sm:$0xff]
    %v975 = vld [vmem:[%s972 + $0x10] sm:$0xff]
    %v976 = vld [vmem:[%s972 + $0x18] sm:$0xff]
    %s977 = scalar_lea.vmem %s5, 1
    %v978 = vld [vmem:[%s977] sm:$0x1]
    %v980 = vperm.slane %v978, 0
    %v983 = vsel %vm70, %v970, 0
    %v986 = vsel %vm70, %v971, 0
    %988 = vmatpush.msra.mxu0 0.0
    %989 = vmatpush.msra.mxu0 0.0
    %990 = vmatpush.msra.mxu0 0.0
    %991 = vmatpush.msra.mxu0 0.0
    %992 = vmatpush.msra.mxu0 0.0
    %993 = vmatpush.msra.mxu0 0.0
    %994 = vmatpush.msra.mxu0 0.0
    %995 = vmatpush.msra.mxu0 0.0
    %996 = vmatpush.msra.mxu0 0.0
    %997 = vmatpush.msra.mxu0 0.0
    %998 = vmatpush.msra.mxu0 0.0
    %999 = vmatpush.msra.mxu0 0.0
    %1000 = vmatpush.msra.mxu0 %v976
    %1001 = vmatpush.msra.mxu0 %v975
    %1002 = vmatpush.msra.mxu0 %v974
    %1003 = vmatpush.msra.mxu0 %v973
    %1004 = vmatmul.f32.gmra.mxu0 %v983
    %v1005 = vpop.f32.mrf.mxu0
    %v1006 = vadd.f32 %v980, %v1005
    %1007 = vmatmul.f32.gmra.mxu0 %v986
    %v1008 = vpop.f32.mrf.mxu0
    %v1009 = vadd.f32 %v980, %v1008
    %1010 = vdwg.mxu0
    %1012 = vrot.lane.b32.xlu0 %v1006, 96
    %v1013 = vpop.permute.xlu0 %1012
    %v1014 = vsel %vm174, %v1006, 0
    %v1016 = vsel %vm174, %v1013, 0
    %1018 = vmatpush.xpose.msra.mxu0 0.0
    %1019 = vmatpush.xpose.msra.mxu0 0.0
    %1020 = vmatpush.xpose.msra.mxu0 0.0
    %1021 = vmatpush.xpose.msra.mxu0 0.0
    %1022 = vmatpush.xpose.msra.mxu0 0.0
    %1023 = vmatpush.xpose.msra.mxu0 0.0
    %1024 = vmatpush.xpose.msra.mxu0 0.0
    %1025 = vmatpush.xpose.msra.mxu0 0.0
    %1026 = vmatpush.xpose.msra.mxu0 0.0
    %1027 = vmatpush.xpose.msra.mxu0 0.0
    %1028 = vmatpush.xpose.msra.mxu0 0.0
    %1029 = vmatpush.xpose.msra.mxu0 0.0
    %1030 = vmatpush.xpose.msra.mxu0 0.0
    %1031 = vmatpush.xpose.msra.mxu0 0.0
    %1032 = vmatpush.xpose.msra.mxu0 0.0
    %1033 = vmatpush.xpose.msra.mxu0 %v1016
    %1034 = vmatmul.f32.gmra.mxu0 %v1014
    %v1035 = vpop.f32.mrf.mxu0
    %v1036 = vadd.f32 %v132, %v1035
    %1037 = vdwg.mxu0
    %v1038 = vsel %vm174, %v1036, -inf
    %1039 = vmax.xlane.f32.xlu0 %v1038
    %v1040 = vpop.xlane.xlu0 %1039
    %v1041 = vsub.f32 %v1036, %v1040
    %v1042 = vmul.f32 %v1041, 1.442695
    %v1043 = vpow.pop %v1042
    %v1044 = vsel %vm174, %v1043, 0.0
    %1045 = vadd.xlane.f32.xlu0 %v1044
    %v1046 = vpop.xlane.xlu0 %1045
    %v1047 = vrcp.pop %v1046
    %v1048 = vmul.f32 %v1043, %v1047
    %1049 = vrot.lane.b32.xlu0 %v1006, 64
    %v1050 = vpop.permute.xlu0 %1049
    %v1053 = vsel %vm174, %v1048, 0
    %1055 = vmatpush.msra.mxu0 0.0
    %1056 = vmatpush.msra.mxu0 0.0
    %1057 = vmatpush.msra.mxu0 0.0
    %1058 = vmatpush.msra.mxu0 0.0
    %1059 = vmatpush.msra.mxu0 0.0
    %1060 = vmatpush.msra.mxu0 0.0
    %1061 = vmatpush.msra.mxu0 0.0
    %1062 = vmatpush.msra.mxu0 0.0
    %1063 = vmatpush.msra.mxu0 0.0
    %1064 = vmatpush.msra.mxu0 0.0
    %1065 = vmatpush.msra.mxu0 0.0
    %1066 = vmatpush.msra.mxu0 0.0
    %1067 = vmatpush.msra.mxu0 0.0
    %1068 = vmatpush.msra.mxu0 0.0
    %1069 = vmatpush.msra.mxu0 0.0
    %1070 = vmatpush.msra.mxu0 %v1050
    %1071 = vmatmul.f32.gmra.mxu0 %v1053
    %v1072 = vpop.f32.mrf.mxu0
    %v1073 = vadd.f32 0.0, %v1072
    %1074 = vdwg.mxu0
    %1075 = vrot.lane.b32.xlu0 %v1006, 120
    %v1076 = vpop.permute.xlu0 %1075
    %1077 = vrot.lane.b32.xlu0 %v1006, 88
    %v1078 = vpop.permute.xlu0 %1077
    %v1079 = vsel %vm174, %v1076, 0
    %v1081 = vsel %vm174, %v1078, 0
    %1083 = vmatpush.xpose.msra.mxu0 0.0
    %1084 = vmatpush.xpose.msra.mxu0 0.0
    %1085 = vmatpush.xpose.msra.mxu0 0.0
    %1086 = vmatpush.xpose.msra.mxu0 0.0
    %1087 = vmatpush.xpose.msra.mxu0 0.0
    %1088 = vmatpush.xpose.msra.mxu0 0.0
    %1089 = vmatpush.xpose.msra.mxu0 0.0
    %1090 = vmatpush.xpose.msra.mxu0 0.0
    %1091 = vmatpush.xpose.msra.mxu0 0.0
    %1092 = vmatpush.xpose.msra.mxu0 0.0
    %1093 = vmatpush.xpose.msra.mxu0 0.0
    %1094 = vmatpush.xpose.msra.mxu0 0.0
    %1095 = vmatpush.xpose.msra.mxu0 0.0
    %1096 = vmatpush.xpose.msra.mxu0 0.0
    %1097 = vmatpush.xpose.msra.mxu0 0.0
    %1098 = vmatpush.xpose.msra.mxu0 %v1081
    %1099 = vmatmul.f32.gmra.mxu0 %v1079
    %v1100 = vpop.f32.mrf.mxu0
    %v1101 = vadd.f32 %v132, %v1100
    %1102 = vdwg.mxu0
    %v1103 = vsel %vm174, %v1101, -inf
    %1104 = vmax.xlane.f32.xlu0 %v1103
    %v1105 = vpop.xlane.xlu0 %1104
    %v1106 = vsub.f32 %v1101, %v1105
    %v1107 = vmul.f32 %v1106, 1.442695
    %v1108 = vpow.pop %v1107
    %v1109 = vsel %vm174, %v1108, 0.0
    %1110 = vadd.xlane.f32.xlu0 %v1109
    %v1111 = vpop.xlane.xlu0 %1110
    %v1112 = vrcp.pop %v1111
    %v1113 = vmul.f32 %v1108, %v1112
    %1114 = vrot.lane.b32.xlu0 %v1006, 56
    %v1115 = vpop.permute.xlu0 %1114
    %v1118 = vsel %vm174, %v1113, 0
    %1120 = vmatpush.msra.mxu0 0.0
    %1121 = vmatpush.msra.mxu0 0.0
    %1122 = vmatpush.msra.mxu0 0.0
    %1123 = vmatpush.msra.mxu0 0.0
    %1124 = vmatpush.msra.mxu0 0.0
    %1125 = vmatpush.msra.mxu0 0.0
    %1126 = vmatpush.msra.mxu0 0.0
    %1127 = vmatpush.msra.mxu0 0.0
    %1128 = vmatpush.msra.mxu0 0.0
    %1129 = vmatpush.msra.mxu0 0.0
    %1130 = vmatpush.msra.mxu0 0.0
    %1131 = vmatpush.msra.mxu0 0.0
    %1132 = vmatpush.msra.mxu0 0.0
    %1133 = vmatpush.msra.mxu0 0.0
    %1134 = vmatpush.msra.mxu0 0.0
    %1135 = vmatpush.msra.mxu0 %v1115
    %1136 = vmatmul.f32.gmra.mxu0 %v1118
    %v1137 = vpop.f32.mrf.mxu0
    %v1138 = vadd.f32 0.0, %v1137
    %1139 = vdwg.mxu0
    %1140 = vrot.lane.b32.xlu0 %v1006, 112
    %v1141 = vpop.permute.xlu0 %1140
    %1142 = vrot.lane.b32.xlu0 %v1006, 80
    %v1143 = vpop.permute.xlu0 %1142
    %v1144 = vsel %vm174, %v1141, 0
    %v1146 = vsel %vm174, %v1143, 0
    %1148 = vmatpush.xpose.msra.mxu0 0.0
    %1149 = vmatpush.xpose.msra.mxu0 0.0
    %1150 = vmatpush.xpose.msra.mxu0 0.0
    %1151 = vmatpush.xpose.msra.mxu0 0.0
    %1152 = vmatpush.xpose.msra.mxu0 0.0
    %1153 = vmatpush.xpose.msra.mxu0 0.0
    %1154 = vmatpush.xpose.msra.mxu0 0.0
    %1155 = vmatpush.xpose.msra.mxu0 0.0
    %1156 = vmatpush.xpose.msra.mxu0 0.0
    %1157 = vmatpush.xpose.msra.mxu0 0.0
    %1158 = vmatpush.xpose.msra.mxu0 0.0
    %1159 = vmatpush.xpose.msra.mxu0 0.0
    %1160 = vmatpush.xpose.msra.mxu0 0.0
    %1161 = vmatpush.xpose.msra.mxu0 0.0
    %1162 = vmatpush.xpose.msra.mxu0 0.0
    %1163 = vmatpush.xpose.msra.mxu0 %v1146
    %1164 = vmatmul.f32.gmra.mxu0 %v1144
    %v1165 = vpop.f32.mrf.mxu0
    %v1166 = vadd.f32 %v132, %v1165
    %1167 = vdwg.mxu0
    %v1168 = vsel %vm174, %v1166, -inf
    %1169 = vmax.xlane.f32.xlu0 %v1168
    %v1170 = vpop.xlane.xlu0 %1169
    %v1171 = vsub.f32 %v1166, %v1170
    %v1172 = vmul.f32 %v1171, 1.442695
    %v1173 = vpow.pop %v1172
    %v1174 = vsel %vm174, %v1173, 0.0
    %1175 = vadd.xlane.f32.xlu0 %v1174
    %v1176 = vpop.xlane.xlu0 %1175
    %v1177 = vrcp.pop %v1176
    %v1178 = vmul.f32 %v1173, %v1177
    %1179 = vrot.lane.b32.xlu0 %v1006, 48
    %v1180 = vpop.permute.xlu0 %1179
    %v1183 = vsel %vm174, %v1178, 0
    %1185 = vmatpush.msra.mxu0 0.0
    %1186 = vmatpush.msra.mxu0 0.0
    %1187 = vmatpush.msra.mxu0 0.0
    %1188 = vmatpush.msra.mxu0 0.0
    %1189 = vmatpush.msra.mxu0 0.0
    %1190 = vmatpush.msra.mxu0 0.0
    %1191 = vmatpush.msra.mxu0 0.0
    %1192 = vmatpush.msra.mxu0 0.0
    %1193 = vmatpush.msra.mxu0 0.0
    %1194 = vmatpush.msra.mxu0 0.0
    %1195 = vmatpush.msra.mxu0 0.0
    %1196 = vmatpush.msra.mxu0 0.0
    %1197 = vmatpush.msra.mxu0 0.0
    %1198 = vmatpush.msra.mxu0 0.0
    %1199 = vmatpush.msra.mxu0 0.0
    %1200 = vmatpush.msra.mxu0 %v1180
    %1201 = vmatmul.f32.gmra.mxu0 %v1183
    %v1202 = vpop.f32.mrf.mxu0
    %v1203 = vadd.f32 0.0, %v1202
    %1204 = vdwg.mxu0
    %1205 = vrot.lane.b32.xlu0 %v1006, 104
    %v1206 = vpop.permute.xlu0 %1205
    %1207 = vrot.lane.b32.xlu0 %v1006, 72
    %v1208 = vpop.permute.xlu0 %1207
    %v1209 = vsel %vm174, %v1206, 0
    %v1211 = vsel %vm174, %v1208, 0
    %1213 = vmatpush.xpose.msra.mxu0 0.0
    %1214 = vmatpush.xpose.msra.mxu0 0.0
    %1215 = vmatpush.xpose.msra.mxu0 0.0
    %1216 = vmatpush.xpose.msra.mxu0 0.0
    %1217 = vmatpush.xpose.msra.mxu0 0.0
    %1218 = vmatpush.xpose.msra.mxu0 0.0
    %1219 = vmatpush.xpose.msra.mxu0 0.0
    %1220 = vmatpush.xpose.msra.mxu0 0.0
    %1221 = vmatpush.xpose.msra.mxu0 0.0
    %1222 = vmatpush.xpose.msra.mxu0 0.0
    %1223 = vmatpush.xpose.msra.mxu0 0.0
    %1224 = vmatpush.xpose.msra.mxu0 0.0
    %1225 = vmatpush.xpose.msra.mxu0 0.0
    %1226 = vmatpush.xpose.msra.mxu0 0.0
    %1227 = vmatpush.xpose.msra.mxu0 0.0
    %1228 = vmatpush.xpose.msra.mxu0 %v1211
    %1229 = vmatmul.f32.gmra.mxu0 %v1209
    %v1230 = vpop.f32.mrf.mxu0
    %v1231 = vadd.f32 %v132, %v1230
    %1232 = vdwg.mxu0
    %v1233 = vsel %vm174, %v1231, -inf
    %1234 = vmax.xlane.f32.xlu0 %v1233
    %v1235 = vpop.xlane.xlu0 %1234
    %v1236 = vsub.f32 %v1231, %v1235
    %v1237 = vmul.f32 %v1236, 1.442695
    %v1238 = vpow.pop %v1237
    %v1239 = vsel %vm174, %v1238, 0.0
    %1240 = vadd.xlane.f32.xlu0 %v1239
    %v1241 = vpop.xlane.xlu0 %1240
    %v1242 = vrcp.pop %v1241
    %v1243 = vmul.f32 %v1238, %v1242
    %1244 = vrot.lane.b32.xlu0 %v1006, 40
    %v1245 = vpop.permute.xlu0 %1244
    %v1248 = vsel %vm174, %v1243, 0
    %1250 = vmatpush.msra.mxu0 0.0
    %1251 = vmatpush.msra.mxu0 0.0
    %1252 = vmatpush.msra.mxu0 0.0
    %1253 = vmatpush.msra.mxu0 0.0
    %1254 = vmatpush.msra.mxu0 0.0
    %1255 = vmatpush.msra.mxu0 0.0
    %1256 = vmatpush.msra.mxu0 0.0
    %1257 = vmatpush.msra.mxu0 0.0
    %1258 = vmatpush.msra.mxu0 0.0
    %1259 = vmatpush.msra.mxu0 0.0
    %1260 = vmatpush.msra.mxu0 0.0
    %1261 = vmatpush.msra.mxu0 0.0
    %1262 = vmatpush.msra.mxu0 0.0
    %1263 = vmatpush.msra.mxu0 0.0
    %1264 = vmatpush.msra.mxu0 0.0
    %1265 = vmatpush.msra.mxu0 %v1245
    %1266 = vmatmul.f32.gmra.mxu0 %v1248
    %v1267 = vpop.f32.mrf.mxu0
    %v1268 = vadd.f32 0.0, %v1267
    %1269 = vdwg.mxu0
    %1271 = vrot.lane.b32.xlu0 %v1138, 8
    %v1272 = vpop.permute.xlu0 %1271
    %1275 = vrot.lane.b32.xlu0 %v1203, 16
    %v1276 = vpop.permute.xlu0 %1275
    %1279 = vrot.lane.b32.xlu0 %v1268, 24
    %v1280 = vpop.permute.xlu0 %1279
    %v1282 = vsel %vm174, %v1073, %v1272
    %v1283 = vsel %vm444, %v1282, %v1276
    %v1284 = vsel %vm446, %v1283, %v1280
    %1286 = vrot.lane.b32.xlu0 %v1009, 96
    %v1287 = vpop.permute.xlu0 %1286
    %v1288 = vsel %vm174, %v1009, 0
    %v1290 = vsel %vm174, %v1287, 0
    %1292 = vmatpush.xpose.msra.mxu0 0.0
    %1293 = vmatpush.xpose.msra.mxu0 0.0
    %1294 = vmatpush.xpose.msra.mxu0 0.0
    %1295 = vmatpush.xpose.msra.mxu0 0.0
    %1296 = vmatpush.xpose.msra.mxu0 0.0
    %1297 = vmatpush.xpose.msra.mxu0 0.0
    %1298 = vmatpush.xpose.msra.mxu0 0.0
    %1299 = vmatpush.xpose.msra.mxu0 0.0
    %1300 = vmatpush.xpose.msra.mxu0 0.0
    %1301 = vmatpush.xpose.msra.mxu0 0.0
    %1302 = vmatpush.xpose.msra.mxu0 0.0
    %1303 = vmatpush.xpose.msra.mxu0 0.0
    %1304 = vmatpush.xpose.msra.mxu0 0.0
    %1305 = vmatpush.xpose.msra.mxu0 0.0
    %1306 = vmatpush.xpose.msra.mxu0 0.0
    %1307 = vmatpush.xpose.msra.mxu0 %v1290
    %1308 = vmatmul.f32.gmra.mxu0 %v1288
    %v1309 = vpop.f32.mrf.mxu0
    %v1310 = vadd.f32 %v133, %v1309
    %1311 = vdwg.mxu0
    %v1312 = vsel %vm174, %v1310, -inf
    %1313 = vmax.xlane.f32.xlu0 %v1312
    %v1314 = vpop.xlane.xlu0 %1313
    %v1315 = vsub.f32 %v1310, %v1314
    %v1316 = vmul.f32 %v1315, 1.442695
    %v1317 = vpow.pop %v1316
    %v1318 = vsel %vm174, %v1317, 0.0
    %1319 = vadd.xlane.f32.xlu0 %v1318
    %v1320 = vpop.xlane.xlu0 %1319
    %v1321 = vrcp.pop %v1320
    %v1322 = vmul.f32 %v1317, %v1321
    %1323 = vrot.lane.b32.xlu0 %v1009, 64
    %v1324 = vpop.permute.xlu0 %1323
    %v1327 = vsel %vm174, %v1322, 0
    %1329 = vmatpush.msra.mxu0 0.0
    %1330 = vmatpush.msra.mxu0 0.0
    %1331 = vmatpush.msra.mxu0 0.0
    %1332 = vmatpush.msra.mxu0 0.0
    %1333 = vmatpush.msra.mxu0 0.0
    %1334 = vmatpush.msra.mxu0 0.0
    %1335 = vmatpush.msra.mxu0 0.0
    %1336 = vmatpush.msra.mxu0 0.0
    %1337 = vmatpush.msra.mxu0 0.0
    %1338 = vmatpush.msra.mxu0 0.0
    %1339 = vmatpush.msra.mxu0 0.0
    %1340 = vmatpush.msra.mxu0 0.0
    %1341 = vmatpush.msra.mxu0 0.0
    %1342 = vmatpush.msra.mxu0 0.0
    %1343 = vmatpush.msra.mxu0 0.0
    %1344 = vmatpush.msra.mxu0 %v1324
    %1345 = vmatmul.f32.gmra.mxu0 %v1327
    %v1346 = vpop.f32.mrf.mxu0
    %v1347 = vadd.f32 0.0, %v1346
    %1348 = vdwg.mxu0
    %1349 = vrot.lane.b32.xlu0 %v1009, 120
    %v1350 = vpop.permute.xlu0 %1349
    %1351 = vrot.lane.b32.xlu0 %v1009, 88
    %v1352 = vpop.permute.xlu0 %1351
    %v1353 = vsel %vm174, %v1350, 0
    %v1355 = vsel %vm174, %v1352, 0
    %1357 = vmatpush.xpose.msra.mxu0 0.0
    %1358 = vmatpush.xpose.msra.mxu0 0.0
    %1359 = vmatpush.xpose.msra.mxu0 0.0
    %1360 = vmatpush.xpose.msra.mxu0 0.0
    %1361 = vmatpush.xpose.msra.mxu0 0.0
    %1362 = vmatpush.xpose.msra.mxu0 0.0
    %1363 = vmatpush.xpose.msra.mxu0 0.0
    %1364 = vmatpush.xpose.msra.mxu0 0.0
    %1365 = vmatpush.xpose.msra.mxu0 0.0
    %1366 = vmatpush.xpose.msra.mxu0 0.0
    %1367 = vmatpush.xpose.msra.mxu0 0.0
    %1368 = vmatpush.xpose.msra.mxu0 0.0
    %1369 = vmatpush.xpose.msra.mxu0 0.0
    %1370 = vmatpush.xpose.msra.mxu0 0.0
    %1371 = vmatpush.xpose.msra.mxu0 0.0
    %1372 = vmatpush.xpose.msra.mxu0 %v1355
    %1373 = vmatmul.f32.gmra.mxu0 %v1353
    %v1374 = vpop.f32.mrf.mxu0
    %v1375 = vadd.f32 %v133, %v1374
    %1376 = vdwg.mxu0
    %v1377 = vsel %vm174, %v1375, -inf
    %1378 = vmax.xlane.f32.xlu0 %v1377
    %v1379 = vpop.xlane.xlu0 %1378
    %v1380 = vsub.f32 %v1375, %v1379
    %v1381 = vmul.f32 %v1380, 1.442695
    %v1382 = vpow.pop %v1381
    %v1383 = vsel %vm174, %v1382, 0.0
    %1384 = vadd.xlane.f32.xlu0 %v1383
    %v1385 = vpop.xlane.xlu0 %1384
    %v1386 = vrcp.pop %v1385
    %v1387 = vmul.f32 %v1382, %v1386
    %1388 = vrot.lane.b32.xlu0 %v1009, 56
    %v1389 = vpop.permute.xlu0 %1388
    %v1392 = vsel %vm174, %v1387, 0
    %1394 = vmatpush.msra.mxu0 0.0
    %1395 = vmatpush.msra.mxu0 0.0
    %1396 = vmatpush.msra.mxu0 0.0
    %1397 = vmatpush.msra.mxu0 0.0
    %1398 = vmatpush.msra.mxu0 0.0
    %1399 = vmatpush.msra.mxu0 0.0
    %1400 = vmatpush.msra.mxu0 0.0
    %1401 = vmatpush.msra.mxu0 0.0
    %1402 = vmatpush.msra.mxu0 0.0
    %1403 = vmatpush.msra.mxu0 0.0
    %1404 = vmatpush.msra.mxu0 0.0
    %1405 = vmatpush.msra.mxu0 0.0
    %1406 = vmatpush.msra.mxu0 0.0
    %1407 = vmatpush.msra.mxu0 0.0
    %1408 = vmatpush.msra.mxu0 0.0
    %1409 = vmatpush.msra.mxu0 %v1389
    %1410 = vmatmul.f32.gmra.mxu0 %v1392
    %v1411 = vpop.f32.mrf.mxu0
    %v1412 = vadd.f32 0.0, %v1411
    %1413 = vdwg.mxu0
    %1414 = vrot.lane.b32.xlu0 %v1009, 112
    %v1415 = vpop.permute.xlu0 %1414
    %1416 = vrot.lane.b32.xlu0 %v1009, 80
    %v1417 = vpop.permute.xlu0 %1416
    %v1418 = vsel %vm174, %v1415, 0
    %v1420 = vsel %vm174, %v1417, 0
    %1422 = vmatpush.xpose.msra.mxu0 0.0
    %1423 = vmatpush.xpose.msra.mxu0 0.0
    %1424 = vmatpush.xpose.msra.mxu0 0.0
    %1425 = vmatpush.xpose.msra.mxu0 0.0
    %1426 = vmatpush.xpose.msra.mxu0 0.0
    %1427 = vmatpush.xpose.msra.mxu0 0.0
    %1428 = vmatpush.xpose.msra.mxu0 0.0
    %1429 = vmatpush.xpose.msra.mxu0 0.0
    %1430 = vmatpush.xpose.msra.mxu0 0.0
    %1431 = vmatpush.xpose.msra.mxu0 0.0
    %1432 = vmatpush.xpose.msra.mxu0 0.0
    %1433 = vmatpush.xpose.msra.mxu0 0.0
    %1434 = vmatpush.xpose.msra.mxu0 0.0
    %1435 = vmatpush.xpose.msra.mxu0 0.0
    %1436 = vmatpush.xpose.msra.mxu0 0.0
    %1437 = vmatpush.xpose.msra.mxu0 %v1420
    %1438 = vmatmul.f32.gmra.mxu0 %v1418
    %v1439 = vpop.f32.mrf.mxu0
    %v1440 = vadd.f32 %v133, %v1439
    %1441 = vdwg.mxu0
    %v1442 = vsel %vm174, %v1440, -inf
    %1443 = vmax.xlane.f32.xlu0 %v1442
    %v1444 = vpop.xlane.xlu0 %1443
    %v1445 = vsub.f32 %v1440, %v1444
    %v1446 = vmul.f32 %v1445, 1.442695
    %v1447 = vpow.pop %v1446
    %v1448 = vsel %vm174, %v1447, 0.0
    %1449 = vadd.xlane.f32.xlu0 %v1448
    %v1450 = vpop.xlane.xlu0 %1449
    %v1451 = vrcp.pop %v1450
    %v1452 = vmul.f32 %v1447, %v1451
    %1453 = vrot.lane.b32.xlu0 %v1009, 48
    %v1454 = vpop.permute.xlu0 %1453
    %v1457 = vsel %vm174, %v1452, 0
    %1459 = vmatpush.msra.mxu0 0.0
    %1460 = vmatpush.msra.mxu0 0.0
    %1461 = vmatpush.msra.mxu0 0.0
    %1462 = vmatpush.msra.mxu0 0.0
    %1463 = vmatpush.msra.mxu0 0.0
    %1464 = vmatpush.msra.mxu0 0.0
    %1465 = vmatpush.msra.mxu0 0.0
    %1466 = vmatpush.msra.mxu0 0.0
    %1467 = vmatpush.msra.mxu0 0.0
    %1468 = vmatpush.msra.mxu0 0.0
    %1469 = vmatpush.msra.mxu0 0.0
    %1470 = vmatpush.msra.mxu0 0.0
    %1471 = vmatpush.msra.mxu0 0.0
    %1472 = vmatpush.msra.mxu0 0.0
    %1473 = vmatpush.msra.mxu0 0.0
    %1474 = vmatpush.msra.mxu0 %v1454
    %1475 = vmatmul.f32.gmra.mxu0 %v1457
    %v1476 = vpop.f32.mrf.mxu0
    %v1477 = vadd.f32 0.0, %v1476
    %1478 = vdwg.mxu0
    %1479 = vrot.lane.b32.xlu0 %v1009, 104
    %v1480 = vpop.permute.xlu0 %1479
    %1481 = vrot.lane.b32.xlu0 %v1009, 72
    %v1482 = vpop.permute.xlu0 %1481
    %v1483 = vsel %vm174, %v1480, 0
    %v1485 = vsel %vm174, %v1482, 0
    %1487 = vmatpush.xpose.msra.mxu0 0.0
    %1488 = vmatpush.xpose.msra.mxu0 0.0
    %1489 = vmatpush.xpose.msra.mxu0 0.0
    %1490 = vmatpush.xpose.msra.mxu0 0.0
    %1491 = vmatpush.xpose.msra.mxu0 0.0
    %1492 = vmatpush.xpose.msra.mxu0 0.0
    %1493 = vmatpush.xpose.msra.mxu0 0.0
    %1494 = vmatpush.xpose.msra.mxu0 0.0
    %1495 = vmatpush.xpose.msra.mxu0 0.0
    %1496 = vmatpush.xpose.msra.mxu0 0.0
    %1497 = vmatpush.xpose.msra.mxu0 0.0
    %1498 = vmatpush.xpose.msra.mxu0 0.0
    %1499 = vmatpush.xpose.msra.mxu0 0.0
    %1500 = vmatpush.xpose.msra.mxu0 0.0
    %1501 = vmatpush.xpose.msra.mxu0 0.0
    %1502 = vmatpush.xpose.msra.mxu0 %v1485
    %1503 = vmatmul.f32.gmra.mxu0 %v1483
    %v1504 = vpop.f32.mrf.mxu0
    %v1505 = vadd.f32 %v133, %v1504
    %1506 = vdwg.mxu0
    %v1507 = vsel %vm174, %v1505, -inf
    %1508 = vmax.xlane.f32.xlu0 %v1507
    %v1509 = vpop.xlane.xlu0 %1508
    %v1510 = vsub.f32 %v1505, %v1509
    %v1511 = vmul.f32 %v1510, 1.442695
    %v1512 = vpow.pop %v1511
    %v1513 = vsel %vm174, %v1512, 0.0
    %1514 = vadd.xlane.f32.xlu0 %v1513
    %v1515 = vpop.xlane.xlu0 %1514
    %v1516 = vrcp.pop %v1515
    %v1517 = vmul.f32 %v1512, %v1516
    %1518 = vrot.lane.b32.xlu0 %v1009, 40
    %v1519 = vpop.permute.xlu0 %1518
    %v1522 = vsel %vm174, %v1517, 0
    %1524 = vmatpush.msra.mxu0 0.0
    %1525 = vmatpush.msra.mxu0 0.0
    %1526 = vmatpush.msra.mxu0 0.0
    %1527 = vmatpush.msra.mxu0 0.0
    %1528 = vmatpush.msra.mxu0 0.0
    %1529 = vmatpush.msra.mxu0 0.0
    %1530 = vmatpush.msra.mxu0 0.0
    %1531 = vmatpush.msra.mxu0 0.0
    %1532 = vmatpush.msra.mxu0 0.0
    %1533 = vmatpush.msra.mxu0 0.0
    %1534 = vmatpush.msra.mxu0 0.0
    %1535 = vmatpush.msra.mxu0 0.0
    %1536 = vmatpush.msra.mxu0 0.0
    %1537 = vmatpush.msra.mxu0 0.0
    %1538 = vmatpush.msra.mxu0 0.0
    %1539 = vmatpush.msra.mxu0 %v1519
    %1540 = vmatmul.f32.gmra.mxu0 %v1522
    %v1541 = vpop.f32.mrf.mxu0
    %v1542 = vadd.f32 0.0, %v1541
    %1543 = vdwg.mxu0
    %1545 = vrot.lane.b32.xlu0 %v1412, 8
    %v1546 = vpop.permute.xlu0 %1545
    %1549 = vrot.lane.b32.xlu0 %v1477, 16
    %v1550 = vpop.permute.xlu0 %1549
    %1553 = vrot.lane.b32.xlu0 %v1542, 24
    %v1554 = vpop.permute.xlu0 %1553
    %v1556 = vsel %vm174, %v1347, %v1546
    %v1557 = vsel %vm444, %v1556, %v1550
    %v1558 = vsel %vm446, %v1557, %v1554
    %s1559 = scalar_lea.vmem %s6, 32
    %v1560 = vld [vmem:[%s1559] sm:$0xff]
    %v1561 = vld [vmem:[%s1559 + $0x8] sm:$0xff]
    %v1562 = vld [vmem:[%s1559 + $0x10] sm:$0xff]
    %v1563 = vld [vmem:[%s1559 + $0x18] sm:$0xff]
    %s1564 = scalar_lea.vmem %s7, 1
    %v1565 = vld [vmem:[%s1564] sm:$0x1]
    %v1567 = vperm.slane %v1565, 0
    %v1570 = vsel %vm70, %v1284, 0
    %v1573 = vsel %vm70, %v1558, 0
    %1575 = vmatpush.msra.mxu0 0.0
    %1576 = vmatpush.msra.mxu0 0.0
    %1577 = vmatpush.msra.mxu0 0.0
    %1578 = vmatpush.msra.mxu0 0.0
    %1579 = vmatpush.msra.mxu0 0.0
    %1580 = vmatpush.msra.mxu0 0.0
    %1581 = vmatpush.msra.mxu0 0.0
    %1582 = vmatpush.msra.mxu0 0.0
    %1583 = vmatpush.msra.mxu0 0.0
    %1584 = vmatpush.msra.mxu0 0.0
    %1585 = vmatpush.msra.mxu0 0.0
    %1586 = vmatpush.msra.mxu0 0.0
    %1587 = vmatpush.msra.mxu0 %v1563
    %1588 = vmatpush.msra.mxu0 %v1562
    %1589 = vmatpush.msra.mxu0 %v1561
    %1590 = vmatpush.msra.mxu0 %v1560
    %1591 = vmatmul.f32.gmra.mxu0 %v1570
    %v1592 = vpop.f32.mrf.mxu0
    %v1593 = vadd.f32 %v1567, %v1592
    %1594 = vmatmul.f32.gmra.mxu0 %v1573
    %v1595 = vpop.f32.mrf.mxu0
    %v1596 = vadd.f32 %v1567, %v1595
    %1597 = vdwg.mxu0
    %v1598 = vadd.f32 %v1593, %v970
    %v1599 = vadd.f32 %v1596, %v971
    %s1600 = scalar_lea.vmem %s8, 1
    %v1601 = vld [vmem:[%s1600] sm:$0x1]
    %s1602 = scalar_lea.vmem %s9, 1
    %v1603 = vld [vmem:[%s1602] sm:$0x1]
    %v1604 = vsel %vm70, %v1598, 0.0
    %1605 = vadd.xlane.f32.xlu0 %v1604
    %v1606 = vpop.xlane.xlu0 %1605
    %v1607 = vsel %vm70, %v1599, 0.0
    %1608 = vadd.xlane.f32.xlu0 %v1607
    %v1609 = vpop.xlane.xlu0 %1608
    %v1610 = vmul.f32 %v1606, %v83
    %v1611 = vmul.f32 %v1609, %v83
    %v1612 = vsub.f32 %v1598, %v1610
    %v1613 = vsub.f32 %v1599, %v1611
    %v1614 = vmul.f32 %v1612, %v1612
    %v1615 = vmul.f32 %v1613, %v1613
    %v1616 = vsel %vm70, %v1614, 0.0
    %1617 = vadd.xlane.f32.xlu0 %v1616
    %v1618 = vpop.xlane.xlu0 %1617
    %v1619 = vsel %vm70, %v1615, 0.0
    %1620 = vadd.xlane.f32.xlu0 %v1619
    %v1621 = vpop.xlane.xlu0 %1620
    %v1622 = vmul.f32 %v1618, %v83
    %v1623 = vmul.f32 %v1621, %v83
    %v1624 = vadd.f32 %v1622, 1e-12
    %v1625 = vadd.f32 %v1623, 1e-12
    %v1626 = vrsqrt.pop %v1624
    %v1627 = vmul.f32 %v1626, %v1624
    %v1628 = vmul.f32 %v1627, %v1626
    %v1629 = vmul.f32 0.5, %v1628
    %v1630 = vsub.f32 1.5, %v1629
    %v1631 = vmul.f32 %v1626, %v1630
    %vm1632 = vweird.f32 %v1624
    %vm1633 = vweird.f32 %v1626
    %vm1634 = vmor %vm1632, %vm1633
    %v1635 = vsel %vm1634, %v1626, %v1631
    %v1636 = vrsqrt.pop %v1625
    %v1637 = vmul.f32 %v1636, %v1625
    %v1638 = vmul.f32 %v1637, %v1636
    %v1639 = vmul.f32 0.5, %v1638
    %v1640 = vsub.f32 1.5, %v1639
    %v1641 = vmul.f32 %v1636, %v1640
    %vm1642 = vweird.f32 %v1625
    %vm1643 = vweird.f32 %v1636
    %vm1644 = vmor %vm1642, %vm1643
    %v1645 = vsel %vm1644, %v1636, %v1641
    %v1646 = vmul.f32 %v1612, %v1635
    %v1647 = vmul.f32 %v1613, %v1645
    %v1649 = vperm.slane %v1601, 0
    %v1651 = vmul.f32 %v1646, %v1649
    %v1652 = vmul.f32 %v1647, %v1649
    %v1654 = vperm.slane %v1603, 0
    %v1656 = vadd.f32 %v1651, %v1654
    %v1657 = vadd.f32 %v1652, %v1654
    %s1658 = scalar_lea.vmem %s10, 32
    %v1659 = vld [vmem:[%s1658] sm:$0xff]
    %v1660 = vld [vmem:[%s1658 + $0x8] sm:$0xff]
    %v1661 = vld [vmem:[%s1658 + $0x10] sm:$0xff]
    %v1662 = vld [vmem:[%s1658 + $0x18] sm:$0xff]
    %s1663 = scalar_lea.vmem %s11, 1
    %v1664 = vld [vmem:[%s1663] sm:$0x1]
    %v1666 = vperm.slane %v1664, 0
    %v1669 = vsel %vm70, %v1656, 0
    %v1672 = vsel %vm70, %v1657, 0
    %1674 = vmatpush.msra.mxu0 0.0
    %1675 = vmatpush.msra.mxu0 0.0
    %1676 = vmatpush.msra.mxu0 0.0
    %1677 = vmatpush.msra.mxu0 0.0
    %1678 = vmatpush.msra.mxu0 0.0
    %1679 = vmatpush.msra.mxu0 0.0
    %1680 = vmatpush.msra.mxu0 0.0
    %1681 = vmatpush.msra.mxu0 0.0
    %1682 = vmatpush.msra.mxu0 0.0
    %1683 = vmatpush.msra.mxu0 0.0
    %1684 = vmatpush.msra.mxu0 0.0
    %1685 = vmatpush.msra.mxu0 0.0
    %1686 = vmatpush.msra.mxu0 %v1662
    %1687 = vmatpush.msra.mxu0 %v1661
    %1688 = vmatpush.msra.mxu0 %v1660
    %1689 = vmatpush.msra.mxu0 %v1659
    %1690 = vmatmul.f32.gmra.mxu0 %v1669
    %v1691 = vpop.f32.mrf.mxu0
    %v1692 = vadd.f32 %v1666, %v1691
    %1693 = vmatmul.f32.gmra.mxu0 %v1672
    %v1694 = vpop.f32.mrf.mxu0
    %v1695 = vadd.f32 %v1666, %v1694
    %1696 = vdwg.mxu0
    %v1697 = vmul.f32 %v1692, %v1692
    %v1698 = vmul.f32 %v1695, %v1695
    %v1699 = vmul.f32 %v1692, %v1697
    %v1700 = vmul.f32 %v1695, %v1698
    %v1701 = vmul.f32 %v1699, 0.044715
    %v1702 = vmul.f32 %v1700, 0.044715
    %v1703 = vadd.f32 %v1692, %v1701
    %v1704 = vadd.f32 %v1695, %v1702
    %v1705 = vmul.f32 %v1703, 0.7978846
    %v1706 = vmul.f32 %v1704, 0.7978846
    %v1707 = vtanh.pop %v1705
    %v1708 = vtanh.pop %v1706
    %v1709 = vadd.f32 %v1707, 1.0
    %v1710 = vadd.f32 %v1708, 1.0
    %v1711 = vmul.f32 %v1709, 0.5
    %v1712 = vmul.f32 %v1710, 0.5
    %v1713 = vmul.f32 %v1692, %v1711
    %v1714 = vmul.f32 %v1695, %v1712
    %s1715 = scalar_lea.vmem %s12, 64
    %v1716 = vld [vmem:[%s1715] sm:$0xff]
    %v1717 = vld [vmem:[%s1715 + $0x8] sm:$0xff]
    %v1718 = vld [vmem:[%s1715 + $0x10] sm:$0xff]
    %v1719 = vld [vmem:[%s1715 + $0x18] sm:$0xff]
    %v1720 = vld [vmem:[%s1715 + $0x20] sm:$0xff]
    %v1721 = vld [vmem:[%s1715 + $0x28] sm:$0xff]
    %v1722 = vld [vmem:[%s1715 + $0x30] sm:$0xff]
    %v1723 = vld [vmem:[%s1715 + $0x38] sm:$0xff]
    %s1724 = scalar_lea.vmem %s13, 1
    %v1725 = vld [vmem:[%s1724] sm:$0x1]
    %v1727 = vperm.slane %v1725, 0
    %v1730 = vsel %vm884, %v1713, 0
    %v1733 = vsel %vm884, %v1714, 0
    %1735 = vmatpush.msra.mxu0 0.0
    %1736 = vmatpush.msra.mxu0 0.0
    %1737 = vmatpush.msra.mxu0 0.0
    %1738 = vmatpush.msra.mxu0 0.0
    %1739 = vmatpush.msra.mxu0 0.0
    %1740 = vmatpush.msra.mxu0 0.0
    %1741 = vmatpush.msra.mxu0 0.0
    %1742 = vmatpush.msra.mxu0 0.0
    %1743 = vmatpush.msra.mxu0 %v1723
    %1744 = vmatpush.msra.mxu0 %v1722
    %1745 = vmatpush.msra.mxu0 %v1721
    %1746 = vmatpush.msra.mxu0 %v1720
    %1747 = vmatpush.msra.mxu0 %v1719
    %1748 = vmatpush.msra.mxu0 %v1718
    %1749 = vmatpush.msra.mxu0 %v1717
    %1750 = vmatpush.msra.mxu0 %v1716
    %1751 = vmatmul.f32.gmra.mxu0 %v1730
    %v1752 = vpop.f32.mrf.mxu0
    %v1753 = vadd.f32 %v1727, %v1752
    %1754 = vmatmul.f32.gmra.mxu0 %v1733
    %v1755 = vpop.f32.mrf.mxu0
    %v1756 = vadd.f32 %v1727, %v1755
    %1757 = vdwg.mxu0
    %v1758 = vadd.f32 %v1753, %v1656
    %v1759 = vadd.f32 %v1756, %v1657
    %s1760 = scalar_lea.vmem %s14, 1
    %v1761 = vld [vmem:[%s1760] sm:$0x1]
    %s1762 = scalar_lea.vmem %s15, 1
    %v1763 = vld [vmem:[%s1762] sm:$0x1]
    %v1764 = vsel %vm70, %v1758, 0.0
    %1765 = vadd.xlane.f32.xlu0 %v1764
    %v1766 = vpop.xlane.xlu0 %1765
    %v1767 = vsel %vm70, %v1759, 0.0
    %1768 = vadd.xlane.f32.xlu0 %v1767
    %v1769 = vpop.xlane.xlu0 %1768
    %v1770 = vmul.f32 %v1766, %v83
    %v1771 = vmul.f32 %v1769, %v83
    %v1772 = vsub.f32 %v1758, %v1770
    %v1773 = vsub.f32 %v1759, %v1771
    %v1774 = vmul.f32 %v1772, %v1772
    %v1775 = vmul.f32 %v1773, %v1773
    %v1776 = vsel %vm70, %v1774, 0.0
    %1777 = vadd.xlane.f32.xlu0 %v1776
    %v1778 = vpop.xlane.xlu0 %1777
    %v1779 = vsel %vm70, %v1775, 0.0
    %1780 = vadd.xlane.f32.xlu0 %v1779
    %v1781 = vpop.xlane.xlu0 %1780
    %v1782 = vmul.f32 %v1778, %v83
    %v1783 = vmul.f32 %v1781, %v83
    %v1784 = vadd.f32 %v1782, 1e-12
    %v1785 = vadd.f32 %v1783, 1e-12
    %v1786 = vrsqrt.pop %v1784
    %v1787 = vmul.f32 %v1786, %v1784
    %v1788 = vmul.f32 %v1787, %v1786
    %v1789 = vmul.f32 0.5, %v1788
    %v1790 = vsub.f32 1.5, %v1789
    %v1791 = vmul.f32 %v1786, %v1790
    %vm1792 = vweird.f32 %v1784
    %vm1793 = vweird.f32 %v1786
    %vm1794 = vmor %vm1792, %vm1793
    %v1795 = vsel %vm1794, %v1786, %v1791
    %v1796 = vrsqrt.pop %v1785
    %v1797 = vmul.f32 %v1796, %v1785
    %v1798 = vmul.f32 %v1797, %v1796
    %v1799 = vmul.f32 0.5, %v1798
    %v1800 = vsub.f32 1.5, %v1799
    %v1801 = vmul.f32 %v1796, %v1800
    %vm1802 = vweird.f32 %v1785
    %vm1803 = vweird.f32 %v1796
    %vm1804 = vmor %vm1802, %vm1803
    %v1805 = vsel %vm1804, %v1796, %v1801
    %v1806 = vmul.f32 %v1772, %v1795
    %v1807 = vmul.f32 %v1773, %v1805
    %v1809 = vperm.slane %v1761, 0
    %v1811 = vmul.f32 %v1806, %v1809
    %v1812 = vmul.f32 %v1807, %v1809
    %v1814 = vperm.slane %v1763, 0
    %v1816 = vadd.f32 %v1811, %v1814
    %v1817 = vadd.f32 %v1812, %v1814
    %v1819 = vrot.slane %v1817, 7
    %vm1821 = vcmask 1040384
    %v1822 = vsel %vm1821, %v1816, %v1819
    %v1823 = vld [vmem:[%s16] sm:$0xff]
    %v1824 = vld [vmem:[%s16 + $0x8] sm:$0xff]
    %v1825 = vld [vmem:[%s16 + $0x10] sm:$0xff]
    %v1826 = vld [vmem:[%s16 + $0x18] sm:$0xff]
    %v1827 = vld [vmem:[%s17] sm:$0x1]
    %v1829 = vperm.slane %v1827, 0
    %v1832 = vsel %vm70, %v1822, 0
    %1834 = vmatpush.msra.mxu0 0.0
    %1835 = vmatpush.msra.mxu0 0.0
    %1836 = vmatpush.msra.mxu0 0.0
    %1837 = vmatpush.msra.mxu0 0.0
    %1838 = vmatpush.msra.mxu0 0.0
    %1839 = vmatpush.msra.mxu0 0.0
    %1840 = vmatpush.msra.mxu0 0.0
    %1841 = vmatpush.msra.mxu0 0.0
    %1842 = vmatpush.msra.mxu0 0.0
    %1843 = vmatpush.msra.mxu0 0.0
    %1844 = vmatpush.msra.mxu0 0.0
    %1845 = vmatpush.msra.mxu0 0.0
    %1846 = vmatpush.msra.mxu0 %v1826
    %1847 = vmatpush.msra.mxu0 %v1825
    %1848 = vmatpush.msra.mxu0 %v1824
    %1849 = vmatpush.msra.mxu0 %v1823
    %1850 = vmatmul.f32.gmra.mxu0 %v1832
    %v1851 = vpop.f32.mrf.mxu0
    %v1852 = vadd.f32 %v1829, %v1851
    %1853 = vdwg.mxu0
    %v1854 = vtanh.pop %v1852
    %v1855 = vld [vmem:[%s18] sm:$0xff]
    %v1856 = vld [vmem:[%s18 + $0x8] sm:$0xff]
    %v1857 = vld [vmem:[%s18 + $0x10] sm:$0xff]
    %v1858 = vld [vmem:[%s18 + $0x18] sm:$0xff]
    %v1859 = vld [vmem:[%s19] sm:$0x1]
    %v1861 = vperm.slane %v1859, 0
    %v1864 = vsel %vm70, %v1854, 0
    %1866 = vmatpush.msra.mxu0 0.0
    %1867 = vmatpush.msra.mxu0 0.0
    %1868 = vmatpush.msra.mxu0 0.0
    %1869 = vmatpush.msra.mxu0 0.0
    %1870 = vmatpush.msra.mxu0 0.0
    %1871 = vmatpush.msra.mxu0 0.0
    %1872 = vmatpush.msra.mxu0 0.0
    %1873 = vmatpush.msra.mxu0 0.0
    %1874 = vmatpush.msra.mxu0 0.0
    %1875 = vmatpush.msra.mxu0 0.0
    %1876 = vmatpush.msra.mxu0 0.0
    %1877 = vmatpush.msra.mxu0 0.0
    %1878 = vmatpush.msra.mxu0 %v1858
    %1879 = vmatpush.msra.mxu0 %v1857
    %1880 = vmatpush.msra.mxu0 %v1856
    %1881 = vmatpush.msra.mxu0 %v1855
    %1882 = vmatmul.f32.gmra.mxu0 %v1864
    %v1883 = vpop.f32.mrf.mxu0
    %v1884 = vadd.f32 %v1861, %v1883
    %1885 = vdwg.mxu0
    %1886 = vst [vmem:[#allocation2] sm:$0x3] %v1884
    // Predicated region
    $region82: #{bert_model_1_forward.1} parent=1 // pred_check
      _
    $region83: #{bert_model_1_forward.1} parent=1 // pred_check_branch
      %1888 = sbr.rel (0) target = $region85
    $region84: #{bert_model_1_forward.1} parent=1 // pred_region
      %1890 = vsyncadd [#allocation3], 0
      %s1892 = sshll.u32 [#allocation2], 4
      %s1893 = int_to_ptr.vmem [resolvable:$true] %s1892
      %s1894 = sshll.u32 %s20, 4
      %s1895 = int_to_ptr.hbm [resolvable:$true] %s1894
      %1897 = dma.vmem_to_hbm [thread:$0]  %s1893, 32, %s1895, [#allocation3]
    $region85: #{bert_model_1_forward.1} parent=1 // pred_fallthru
      _
    // Predicated region
    $region86: #{bert_model_1_forward.1} parent=1 // pred_check
      _
    $region87: #{bert_model_1_forward.1} parent=1 // pred_check_branch
      %1899 = sbr.rel (0) target = $region89
    $region88: #{bert_model_1_forward.1} parent=1 // pred_region
      %1901 = dma.done [#allocation3], 32
    $region89: #{bert_model_1_forward.1} parent=1 // pred_fallthru
      _
    %1902 = vsyncpa [#allocation3], 1

</llo_original>
